<compile_context>
chip_gen: v7x
topology: tpu7x:2x2x1
jax: 0.10.0
libtpu: 0.0.40
codegen_flags: <defaults>
</compile_context>

<pallas_src>
import math

import jax
import jax.numpy as jnp
from jax.experimental import pallas as pl
from jax.experimental.pallas import tpu as pltpu

EPS = 1e-5


# ---------------------------------------------------------------------------
# Tiling / padding helpers
# ---------------------------------------------------------------------------
def _round_up(v, m):
    return (v + m - 1) // m * m


def _tile(dim, pref, mult):
    """Largest tile <= pref that is a multiple of `mult` and divides the
    mult-rounded extent (no over-padding).  Returns (tile, padded_extent)."""
    dp = _round_up(dim, mult)
    best = mult
    t = mult
    lim = min(pref, dp)
    while t <= lim:
        if dp % t == 0:
            best = t
        t += mult
    return best, dp


def _pad2(a, rows, cols):
    r, c = a.shape
    if r == rows and c == cols:
        return a
    return jnp.pad(a, ((0, rows - r), (0, cols - c)))


# ---------------------------------------------------------------------------
# Pallas kernels
# ---------------------------------------------------------------------------
def _gemm_stats_kernel(x_ref, w_ref, y_ref, stats_ref, acc_ref):
    """Tiled GEMM (bf16 x bf16 -> f32 acc) + per-column sum / sum-of-squares.

    grid = (nM, nN, nK) -> (i, j, k); k innermost (reduction, "arbitrary").
    y block    : (tm, tn) at (i, j)  -> resident across k.
    stats block: (8, tn)  at (i, j)  -> PARTIAL stats for this M tile
                 (row 0 = sum, row 1 = sum of squares); reduced over i in JAX,
                 which keeps both i and j grid axes "parallel".
    """
    k = pl.program_id(2)
    nk = pl.num_programs(2)

    @pl.when(k == 0)
    def _():
        acc_ref[...] = jnp.zeros_like(acc_ref)
        stats_ref[...] = jnp.zeros_like(stats_ref)

    acc_ref[...] += jnp.dot(x_ref[...], w_ref[...],
                            preferred_element_type=jnp.float32)

    @pl.when(k == nk - 1)
    def _():
        y = acc_ref[...]
        y_ref[...] = y.astype(y_ref.dtype)
        stats_ref[0:1, :] = jnp.sum(y, axis=0, keepdims=True)
        stats_ref[1:2, :] = jnp.sum(y * y, axis=0, keepdims=True)


def _make_conv3x3_kernel(H, W, dil, nb):
    """Direct 3x3 / stride-1 / pad=dil conv: in-kernel 9-tap reduction over the
    spatially zero-padded NHWC input (no im2col patch matrix in HBM).

    grid = (nB, nN, nK) -> (b, j, k):
      x block : (nb, H+2d, W+2d, tk)  whole padded image for nb batch elems
      w block : (3, 3, tk, tn)
      y block : (nb*H*W, tn) at (b, j) -> resident across k (f32 acc scratch)
      stats   : (8, tn) at (b, j)      -> partial BN stats for this batch block.
    """

    def kernel(x_ref, w_ref, y_ref, stats_ref, acc_ref):
        k = pl.program_id(2)
        nk = pl.num_programs(2)

        @pl.when(k == 0)
        def _():
            acc_ref[...] = jnp.zeros_like(acc_ref)
            stats_ref[...] = jnp.zeros_like(stats_ref)

        for n in range(nb):
            rows = slice(n * H * W, (n + 1) * H * W)
            for dy in range(3):
                for dx in range(3):
                    patch = x_ref[n,
                                  dy * dil:dy * dil + H,
                                  dx * dil:dx * dil + W, :]
                    acc_ref[rows, :] += jnp.dot(
                        patch.reshape(H * W, patch.shape[-1]),
                        w_ref[dy, dx],
                        preferred_element_type=jnp.float32)

        @pl.when(k == nk - 1)
        def _():
            y = acc_ref[...]
            y_ref[...] = y.astype(y_ref.dtype)
            stats_ref[0:1, :] = jnp.sum(y, axis=0, keepdims=True)
            stats_ref[1:2, :] = jnp.sum(y * y, axis=0, keepdims=True)

    return kernel


def _gemm_bias_kernel(x_ref, w_ref, b_ref, o_ref, acc_ref):
    """Tiled GEMM + bias.  grid = (nM, nN, nK) -> (i, j, k)."""
    k = pl.program_id(2)
    nk = pl.num_programs(2)

    @pl.when(k == 0)
    def _():
        acc_ref[...] = jnp.zeros_like(acc_ref)

    acc_ref[...] += jnp.dot(x_ref[...], w_ref[...],
                            preferred_element_type=jnp.float32)

    @pl.when(k == nk - 1)
    def _():
        o_ref[...] = (acc_ref[...] + b_ref[0:1, :]).astype(o_ref.dtype)


def _make_bn_apply_kernel(relu: bool, has_res: bool):
    """Elementwise pass: y * scale + bias (+ residual) (ReLU) -> bf16."""

    def kernel(*refs):
        if has_res:
            y_ref, s_ref, b_ref, r_ref, o_ref = refs
        else:
            y_ref, s_ref, b_ref, o_ref = refs
        y = y_ref[...].astype(jnp.float32) * s_ref[0:1, :] + b_ref[0:1, :]
        if has_res:
            y = y + r_ref[...].astype(jnp.float32)
        if relu:
            y = jnp.maximum(y, 0.0)
        o_ref[...] = y.astype(o_ref.dtype)

    return kernel


def _make_attn_kernel(scale: float):
    """Single-query attention: q (tb,1,Dh), k/v (tb,L,Dh) bf16 -> o (tb,1,Dh) f32."""

    def kernel(q_ref, k_ref, v_ref, o_ref):
        s = jnp.einsum("bqd,bkd->bqk", q_ref[...], k_ref[...],
                       preferred_element_type=jnp.float32) * scale
        s = s - jnp.max(s, axis=-1, keepdims=True)
        p = jnp.exp(s)
        p = p * pl.reciprocal(jnp.sum(p, axis=-1, keepdims=True), approx=True)
        o_ref[...] = jnp.einsum("bqk,bkd->bqd", p.astype(v_ref.dtype), v_ref[...],
                                preferred_element_type=jnp.float32)

    return kernel


# ---------------------------------------------------------------------------
# Pallas-call wrappers
# ---------------------------------------------------------------------------
def gemm_stats(x, w):
    """y = x @ w (zero-padded) and per-column sum / sum-of-squares of y.

    x: (M, Kx); any columns beyond w.shape[0] must be zero (channel padding).
    w: (Kt, Nt).  Returns (y (Mp, Np) bf16, col_sum (Np,), col_sumsq (Np,))."""
    M, Kx = x.shape
    Kt, Nt = w.shape
    Np = _round_up(Nt, 128)
    tm, Mp = _tile(M, 512, 8)
    tn, _ = _tile(Np, 512, 128)
    tk, Kp = _tile(Kx, 512, 128)

    xp = _pad2(x.astype(jnp.bfloat16), Mp, Kp)
    wp = _pad2(w.astype(jnp.bfloat16), Kp, Np)
    nM, nN, nK = Mp // tm, Np // tn, Kp // tk

    y, stats = pl.pallas_call(
        _gemm_stats_kernel,
        grid=(nM, nN, nK),
        in_specs=[
            pl.BlockSpec((tm, tk), lambda i, j, k: (i, k)),
            pl.BlockSpec((tk, tn), lambda i, j, k: (k, j)),
        ],
        out_specs=[
            pl.BlockSpec((tm, tn), lambda i, j, k: (i, j)),
            pl.BlockSpec((8, tn), lambda i, j, k: (i, j)),
        ],
        out_shape=[
            jax.ShapeDtypeStruct((Mp, Np), jnp.bfloat16),
            jax.ShapeDtypeStruct((nM * 8, Np), jnp.float32),
        ],
        scratch_shapes=[pltpu.VMEM((tm, tn), jnp.float32)],
        compiler_params=pltpu.CompilerParams(
            dimension_semantics=("parallel", "parallel", "arbitrary")),
    )(xp, wp)

    st = stats.reshape(nM, 8, Np)
    return y, st[:, 0, :].sum(axis=0), st[:, 1, :].sum(axis=0)


def conv3x3_stats(x, w, dil):
    """Direct 3x3 / stride-1 / pad=dil conv with fused BN-stat partials.

    x: (N, H, W, Cp) bf16, channel-padded; w: (3, 3, cin, cout).
    Returns (y (N*H*W, Np) bf16, col_sum (Np,), col_sumsq (Np,))."""
    N, H, W, Cp = x.shape
    cin, cout = w.shape[2], w.shape[3]
    Np = _round_up(cout, 128)
    Kp = _round_up(Cp, 128)
    if Kp != Cp:
        x = jnp.pad(x, ((0, 0), (0, 0), (0, 0), (0, Kp - Cp)))
    wp = jnp.pad(w.astype(jnp.bfloat16),
                 ((0, 0), (0, 0), (0, Kp - cin), (0, Np - cout)))
    xp = jnp.pad(x, ((0, 0), (dil, dil), (dil, dil), (0, 0)))

    # Batch-block so the output M block is a multiple of 8 (or the full M).
    nb = 1 if (H * W) % 8 == 0 else N
    nB = N // nb
    M = N * H * W
    tk, _ = _tile(Kp, 512, 128)
    tn, _ = _tile(Np, 256, 128)
    Hp2, Wp2 = H + 2 * dil, W + 2 * dil

    y, stats = pl.pallas_call(
        _make_conv3x3_kernel(H, W, dil, nb),
        grid=(nB, Np // tn, Kp // tk),
        in_specs=[
            pl.BlockSpec((nb, Hp2, Wp2, tk), lambda b, j, k: (b, 0, 0, k)),
            pl.BlockSpec((3, 3, tk, tn), lambda b, j, k: (0, 0, k, j)),
        ],
        out_specs=[
            pl.BlockSpec((nb * H * W, tn), lambda b, j, k: (b, j)),
            pl.BlockSpec((8, tn), lambda b, j, k: (b, j)),
        ],
        out_shape=[
            jax.ShapeDtypeStruct((M, Np), jnp.bfloat16),
            jax.ShapeDtypeStruct((nB * 8, Np), jnp.float32),
        ],
        scratch_shapes=[pltpu.VMEM((nb * H * W, tn), jnp.float32)],
        compiler_params=pltpu.CompilerParams(
            dimension_semantics=("parallel", "parallel", "arbitrary")),
    )(xp, wp)

    st = stats.reshape(nB, 8, Np)
    return y, st[:, 0, :].sum(axis=0), st[:, 1, :].sum(axis=0)


def _bn_scale_bias(ssum, ssq, count, gamma, beta):
    """Batch mean / biased variance -> per-channel affine scale/bias, zero-padded
    so padded channels stay exactly 0 after the apply pass."""
    Np = ssum.shape[0]
    mean = ssum / count
    var = jnp.maximum(ssq / count - mean * mean, 0.0)
    gp = jnp.pad(gamma.astype(jnp.float32), (0, Np - gamma.shape[0]))
    bp = jnp.pad(beta.astype(jnp.float32), (0, Np - beta.shape[0]))
    scale = gp * jax.lax.rsqrt(var + EPS)
    bias = bp - mean * scale
    scale8 = jnp.zeros((8, Np), jnp.float32).at[0].set(scale)
    bias8 = jnp.zeros((8, Np), jnp.float32).at[0].set(bias)
    return scale8, bias8


def bn_apply(y, scale8, bias8, residual=None, relu=True):
    """Elementwise BN-apply pass over the padded (Mp, Np) activation."""
    Mp, Np = y.shape
    tm, _ = _tile(Mp, 512, 8)
    tn, _ = _tile(Np, 512, 128)

    args = [y, scale8, bias8]
    in_specs = [
        pl.BlockSpec((tm, tn), lambda i, j: (i, j)),
        pl.BlockSpec((8, tn), lambda i, j: (0, j)),
        pl.BlockSpec((8, tn), lambda i, j: (0, j)),
    ]
    if residual is not None:
        args.append(residual.astype(jnp.bfloat16))
        in_specs.append(pl.BlockSpec((tm, tn), lambda i, j: (i, j)))

    return pl.pallas_call(
        _make_bn_apply_kernel(relu, residual is not None),
        grid=(Mp // tm, Np // tn),
        in_specs=in_specs,
        out_specs=pl.BlockSpec((tm, tn), lambda i, j: (i, j)),
        out_shape=jax.ShapeDtypeStruct((Mp, Np), jnp.bfloat16),
        compiler_params=pltpu.CompilerParams(
            dimension_semantics=("parallel", "parallel")),
    )(*args)


def gemm_bias(x, w, b, out_dtype=jnp.float32):
    """y = x @ w + b with a tiled, bf16-fed, f32-accumulating MXU GEMM."""
    M, K = x.shape
    N = w.shape[1]
    Np = _round_up(N, 128)
    tm, Mp = _tile(M, 512, 8)
    tn, _ = _tile(Np, 512, 128)
    tk, Kp = _tile(K, 512, 128)

    xp = _pad2(x.astype(jnp.bfloat16), Mp, Kp)
    wp = _pad2(w.astype(jnp.bfloat16), Kp, Np)
    b8 = jnp.zeros((8, Np), jnp.float32).at[0, :N].set(b.astype(jnp.float32))

    out = pl.pallas_call(
        _gemm_bias_kernel,
        grid=(Mp // tm, Np // tn, Kp // tk),
        in_specs=[
            pl.BlockSpec((tm, tk), lambda i, j, k: (i, k)),
            pl.BlockSpec((tk, tn), lambda i, j, k: (k, j)),
            pl.BlockSpec((8, tn), lambda i, j, k: (0, j)),
        ],
        out_specs=pl.BlockSpec((tm, tn), lambda i, j, k: (i, j)),
        out_shape=jax.ShapeDtypeStruct((Mp, Np), out_dtype),
        scratch_shapes=[pltpu.VMEM((tm, tn), jnp.float32)],
        compiler_params=pltpu.CompilerParams(
            dimension_semantics=("parallel", "parallel", "arbitrary")),
    )(xp, wp, b8)
    return out[:M, :N]


def attention_single_query(q, k, v, scale):
    """q: (BH, 1, Dh), k/v: (BH, L, Dh) -> (BH, 1, Dh) f32, softmax over L."""
    # TODO(synk): output lane dim is Dh (<128) -> masked stores; negligible here.
    BH, _, Dh = q.shape
    L = k.shape[1]
    tb = BH
    for cand in (128, 64, 32, 16, 8):
        if BH > cand and BH % cand == 0:
            tb = cand
            break
    return pl.pallas_call(
        _make_attn_kernel(scale),
        grid=(BH // tb,),
        in_specs=[
            pl.BlockSpec((tb, 1, Dh), lambda b: (b, 0, 0)),
            pl.BlockSpec((tb, L, Dh), lambda b: (b, 0, 0)),
            pl.BlockSpec((tb, L, Dh), lambda b: (b, 0, 0)),
        ],
        out_specs=pl.BlockSpec((tb, 1, Dh), lambda b: (b, 0, 0)),
        out_shape=jax.ShapeDtypeStruct((BH, 1, Dh), jnp.float32),
        compiler_params=pltpu.CompilerParams(dimension_semantics=("parallel",)),
    )(q.astype(jnp.bfloat16), k.astype(jnp.bfloat16), v.astype(jnp.bfloat16))


# ---------------------------------------------------------------------------
# JAX glue: im2col (stride-2 stem conv only) / pooling / module wiring
# ---------------------------------------------------------------------------
def im2col(x, kh, kw, stride=1, pad=0, dil=1):
    n, h, w, c = x.shape
    xp = jnp.pad(x, ((0, 0), (pad, pad), (pad, pad), (0, 0)))
    ho = (h + 2 * pad - dil * (kh - 1) - 1) // stride + 1
    wo = (w + 2 * pad - dil * (kw - 1) - 1) // stride + 1
    cols = []
    for dy in range(kh):
        for dx in range(kw):
            sl = xp[
                :,
                dy * dil: dy * dil + (ho - 1) * stride + 1: stride,
                dx * dil: dx * dil + (wo - 1) * stride + 1: stride,
                :,
            ]
            cols.append(sl)
    patches = jnp.concatenate(cols, axis=-1)              # (n, ho, wo, kh*kw*c)
    return patches.reshape(n * ho * wo, kh * kw * c), (n, ho, wo)


def conv_bn(x, w, bnp, stride=1, pad=0, dil=1, relu=True, residual=None):
    """conv -> BatchNorm(batch stats) [-> +residual] [-> ReLU].

    Activations are NHWC bf16 with the channel dim zero-padded to a multiple of
    128; padded channels stay exactly 0 (gamma/beta padded with zeros), so no
    per-layer pad/slice copies are needed."""
    kh, kw, cin, cout = w.shape
    n = x.shape[0]
    Np = _round_up(cout, 128)

    if kh == 1 and kw == 1 and stride == 1:
        _, ho, wo, cp_in = x.shape
        y, ssum, ssq = gemm_stats(x.reshape(n * ho * wo, cp_in),
                                  w.reshape(cin, cout))
    elif kh == 3 and kw == 3 and stride == 1 and pad == dil:
        ho, wo = x.shape[1], x.shape[2]
        y, ssum, ssq = conv3x3_stats(x, w, dil)
    else:
        # TODO(synk): the single stride-2 stem conv (3 input channels) still uses
        # an im2col patch matrix; in-kernel taps with strided windows not wired up.
        cols, (n, ho, wo) = im2col(x[..., :cin], kh, kw, stride, pad, dil)
        y, ssum, ssq = gemm_stats(cols, w.reshape(kh * kw * cin, cout))

    M = n * ho * wo
    Mp = y.shape[0]
    scale8, bias8 = _bn_scale_bias(ssum, ssq, M, bnp["gamma"], bnp["beta"])

    res2 = None
    if residual is not None:
        res2 = residual.reshape(M, Np)
        if Mp != M:
            res2 = jnp.pad(res2, ((0, Mp - M), (0, 0)))

    out = bn_apply(y, scale8, bias8, residual=res2, relu=relu)
    if Mp != M:
        out = out[:M]
    return out.reshape(n, ho, wo, Np)


def avg_pool(x, k):
    if k == 1:
        return x
    n, h, w, c = x.shape
    return x.reshape(n, h // k, k, w // k, k, c).mean(axis=(2, 4))


def bottleneck_forward(x, p):
    stride, dil = p["stride"], p["dilation"]
    out = conv_bn(x, p["conv1_w"], p["bn1"], relu=True)
    out = conv_bn(out, p["conv2_w"], p["bn2"], pad=dil, dil=dil, relu=True)
    if stride > 1:
        out = avg_pool(out, stride)
    if "down_conv_w" in p:
        idn = avg_pool(x, p["down_stride"])
        idn = conv_bn(idn, p["down_conv_w"], p["down_bn"], relu=False)
    else:
        idn = x
    # conv3 + bn3 + residual + relu fused into the GEMM/BN-apply pair
    return conv_bn(out, p["conv3_w"], p["bn3"], relu=True, residual=idn)


def attnpool_forward(p, x, num_heads):
    N, H, W, Cp = x.shape
    E = p["pos_emb"].shape[1]
    x = x[..., :E]                                                     # drop channel pad
    tokens = x.reshape(N, H * W, E).transpose(1, 0, 2).astype(jnp.float32)
    mean_tok = jnp.mean(tokens, axis=0, keepdims=True)
    tokens = jnp.concatenate([mean_tok, tokens], axis=0)               # (L, N, E)
    tokens = tokens + p["pos_emb"][:, None, :]
    L = tokens.shape[0]
    Dh = E // num_heads
    scale = Dh ** -0.5

    # Fused QKV projection: one tiled GEMM (bf16 output halves writeback).
    w_qkv = jnp.concatenate([p["wq"], p["wk"], p["wv"]], axis=1)       # (E, 3E)
    b_qkv = jnp.concatenate([p["bq"], p["bk"], p["bv"]])               # (3E,)
    qkv = gemm_bias(tokens.reshape(L * N, E), w_qkv, b_qkv,
                    out_dtype=jnp.bfloat16)                            # (L*N, 3E)
    qkv = qkv.reshape(L, N, 3, num_heads, Dh)

    # Only the query token (index 0) is needed: softmax rows are independent,
    # so restricting q to token 0 reproduces torch's x[0] exactly.
    q0 = qkv[0, :, 0].reshape(N * num_heads, 1, Dh)
    k = qkv[:, :, 1].transpose(1, 2, 0, 3).reshape(N * num_heads, L, Dh)
    v = qkv[:, :, 2].transpose(1, 2, 0, 3).reshape(N * num_heads, L, Dh)

    o = attention_single_query(q0, k, v, scale)                        # (N*heads, 1, Dh)
    o = o.reshape(N, num_heads * Dh)                                   # heads contiguous
    return gemm_bias(o, p["wc"], p["bc"], out_dtype=jnp.float32)       # (N, output_dim)


def clip_encoder_forward(params, x_nchw):
    # == CLIP_encoder.forward(x, trunc1..4=False, get1..4=False): full path.
    x = jnp.transpose(x_nchw, (0, 2, 3, 1)).astype(jnp.bfloat16)       # NCHW -> NHWC
    s = params["stem"]
    x = conv_bn(x, s["conv1_w"], s["bn1"], stride=2, pad=1)
    x = conv_bn(x, s["conv2_w"], s["bn2"], pad=1)
    x = conv_bn(x, s["conv3_w"], s["bn3"], pad=1)
    x = avg_pool(x, 2)
    for name in ("layer1", "layer2", "layer3", "layer4"):
        for blk in params[name]:
            x = bottleneck_forward(x, blk)
    return attnpool_forward(params["attnpool"], x, params["heads"])


# ---------------------------------------------------------------------------
# Deterministic parameter construction (synthetic init, no checkpoint load)
# ---------------------------------------------------------------------------
class _Keys:
    def __init__(self, seed=0):
        self._key = jax.random.PRNGKey(seed)

    def __call__(self):
        self._key, sub = jax.random.split(self._key)
        return sub


def _conv_w(kg, kh, kw, cin, cout):
    fan_in = kh * kw * cin
    return jax.random.normal(kg(), (kh, kw, cin, cout), jnp.float32) / math.sqrt(fan_in)


def _bn(c):
    return {"gamma": jnp.ones((c,), jnp.float32), "beta": jnp.zeros((c,), jnp.float32)}


def _bottleneck_params(kg, inplanes, planes, stride=1, dilation=1):
    p = {
        "stride": stride,
        "dilation": dilation,
        "conv1_w": _conv_w(kg, 1, 1, inplanes, planes),
        "bn1": _bn(planes),
        "conv2_w": _conv_w(kg, 3, 3, planes, planes),
        "bn2": _bn(planes),
        "conv3_w": _conv_w(kg, 1, 1, planes, planes * 4),
        # CLIP_encoder.initialize_parameters(): bn3.weight zeroed in layers 1-4
        "bn3": {
            "gamma": jnp.zeros((planes * 4,), jnp.float32),
            "beta": jnp.zeros((planes * 4,), jnp.float32),
        },
    }
    if stride > 1 or inplanes != planes * 4:
        p["down_stride"] = stride
        p["down_conv_w"] = _conv_w(kg, 1, 1, inplanes, planes * 4)
        p["down_bn"] = _bn(planes * 4)
    return p


def make_clip_encoder_params(
    embed_dim, image_resolution, vision_layers, vision_width,
    replace_stride_with_dilation, seed=0,
):
    kg = _Keys(seed)
    width = vision_width
    heads = width * 32 // 64
    p = {"heads": heads}
    p["stem"] = {
        "conv1_w": _conv_w(kg, 3, 3, 3, width // 2),
        "bn1": _bn(width // 2),
        "conv2_w": _conv_w(kg, 3, 3, width // 2, width // 2),
        "bn2": _bn(width // 2),
        "conv3_w": _conv_w(kg, 3, 3, width // 2, width),
        "bn3": _bn(width),
    }

    inplanes = width
    dilation = 1

    def make_layer(planes, blocks, stride=1, dilate=False):
        nonlocal inplanes, dilation
        previous_dilation = dilation
        if dilate:
            dilation *= stride
            stride = 1
        layers = [_bottleneck_params(kg, inplanes, planes, stride)]
        inplanes = planes * 4
        for _ in range(1, blocks - 1):
            layers.append(_bottleneck_params(kg, inplanes, planes, dilation=previous_dilation))
        layers.append(_bottleneck_params(kg, inplanes, planes, dilation=dilation))
        return layers

    p["layer1"] = make_layer(width, vision_layers[0])
    p["layer2"] = make_layer(width * 2, vision_layers[1], stride=2,
                             dilate=replace_stride_with_dilation[0])
    p["layer3"] = make_layer(width * 4, vision_layers[2], stride=2,
                             dilate=replace_stride_with_dilation[1])
    p["layer4"] = make_layer(width * 8, vision_layers[3], stride=2,
                             dilate=replace_stride_with_dilation[2])

    E = width * 32
    spacial = image_resolution // 32
    p["attnpool"] = {
        "pos_emb": jax.random.normal(kg(), (spacial * spacial + 1, E), jnp.float32)
        / math.sqrt(E),
        "wq": jax.random.normal(kg(), (E, E), jnp.float32) / math.sqrt(E),
        "bq": jnp.zeros((E,), jnp.float32),
        "wk": jax.random.normal(kg(), (E, E), jnp.float32) / math.sqrt(E),
        "bk": jnp.zeros((E,), jnp.float32),
        "wv": jax.random.normal(kg(), (E, E), jnp.float32) / math.sqrt(E),
        "bv": jnp.zeros((E,), jnp.float32),
        "wc": jax.random.normal(kg(), (E, embed_dim), jnp.float32) / math.sqrt(E),
        "bc": jnp.zeros((embed_dim,), jnp.float32),
    }
    return p


# ---------------------------------------------------------------------------
if __name__ == "__main__":
    embed_dim = 64
    image_resolution = 64          # small, still divisible by 32 (attnpool needs //32)
    vision_layers = (1, 1, 1, 1)   # each _make_layer still builds 2 bottlenecks
    vision_width = 8
    replace_stride_with_dilation = [False, False, False]

    params = make_clip_encoder_params(
        embed_dim, image_resolution, vision_layers, vision_width,
        replace_stride_with_dilation, seed=0,
    )
    x = jax.random.normal(
        jax.random.PRNGKey(0), (2, 3, image_resolution, image_resolution), jnp.float32
    )

    out = clip_encoder_forward(params, x)
    out = jax.block_until_ready(out)
    assert out.shape == (2, embed_dim), out.shape
    assert jnp.all(jnp.isfinite(out))
    print("KERNEL_OK")
</pallas_src>

<mosaic_0001>
module attributes {stable_mosaic.version = 11 : i64} {
  func.func @_gemm_stats_kernel(%arg0: i32, %arg1: i32, %arg2: i32, %arg3: memref<512x128xbf16, #tpu.memory_space<vmem>>, %arg4: memref<128x128xbf16, #tpu.memory_space<vmem>>, %arg5: memref<512x128xbf16, #tpu.memory_space<vmem>>, %arg6: memref<8x128xf32, #tpu.memory_space<vmem>>, %arg7: memref<512x128xf32, #tpu.memory_space<vmem>>) attributes {dimension_semantics = [#tpu.dimension_semantics<parallel>, #tpu.dimension_semantics<parallel>, #tpu.dimension_semantics<arbitrary>], iteration_bounds = array<i64: 4, 1, 1>, scalar_prefetch = 0 : i64, scratch_operands = 1 : i64, tpu.core_type = #tpu.core_type<tc>, window_params = [{transform_indices = @transform_0, window_bounds = array<i64: 512, 128>}, {transform_indices = @transform_1, window_bounds = array<i64: 128, 128>}, {transform_indices = @transform_2, window_bounds = array<i64: 512, 128>}, {transform_indices = @transform_3, window_bounds = array<i64: 8, 128>}]} {
    %c0_i32 = arith.constant 0 : i32
    %0 = arith.cmpi eq, %arg2, %c0_i32 : i32
    %1 = arith.extui %0 : i1 to i32
    %c0_i32_0 = arith.constant 0 : i32
    %2 = arith.cmpi ne, %1, %c0_i32_0 : i32
    scf.if %2 {
      %cst_10 = arith.constant 0.000000e+00 : f32
      %12 = vector.broadcast %cst_10 : f32 to vector<512x128xf32>
      %c0_11 = arith.constant 0 : index
      %c0_12 = arith.constant 0 : index
      %13 = vector.load %arg7[%c0_11, %c0_12] : memref<512x128xf32, #tpu.memory_space<vmem>>, vector<512x128xf32>
      tpu.vector_store %arg7[%c0_11, %c0_12], %12 {strides = array<i32>} : memref<512x128xf32, #tpu.memory_space<vmem>>, vector<512x128xf32>,
      %cst_13 = arith.constant 0.000000e+00 : f32
      %14 = vector.broadcast %cst_13 : f32 to vector<8x128xf32>
      %c0_14 = arith.constant 0 : index
      %c0_15 = arith.constant 0 : index
      %15 = vector.load %arg6[%c0_14, %c0_15] : memref<8x128xf32, #tpu.memory_space<vmem>>, vector<8x128xf32>
      tpu.vector_store %arg6[%c0_14, %c0_15], %14 {strides = array<i32>} : memref<8x128xf32, #tpu.memory_space<vmem>>, vector<8x128xf32>,
    } else {
    }
    %c0 = arith.constant 0 : index
    %c0_1 = arith.constant 0 : index
    %3 = vector.load %arg7[%c0, %c0_1] : memref<512x128xf32, #tpu.memory_space<vmem>>, vector<512x128xf32>
    %c0_2 = arith.constant 0 : index
    %c0_3 = arith.constant 0 : index
    %4 = vector.load %arg3[%c0_2, %c0_3] : memref<512x128xbf16, #tpu.memory_space<vmem>>, vector<512x128xbf16>
    %c0_4 = arith.constant 0 : index
    %c0_5 = arith.constant 0 : index
    %5 = vector.load %arg4[%c0_4, %c0_5] : memref<128x128xbf16, #tpu.memory_space<vmem>>, vector<128x128xbf16>
    %cst = arith.constant dense<0.000000e+00> : vector<512x128xf32>
    %6 = tpu.matmul %4, %5, %cst {dimension_numbers = #tpu.dot_dimension_numbers<[1], [0], [0], [1], [0, 0, 1, 1], [], []>} : vector<512x128xbf16>, vector<128x128xbf16>, vector<512x128xf32> -> vector<512x128xf32>
    %7 = arith.addf %3, %6 : vector<512x128xf32>
    %c0_6 = arith.constant 0 : index
    %c0_7 = arith.constant 0 : index
    %8 = vector.load %arg7[%c0_6, %c0_7] : memref<512x128xf32, #tpu.memory_space<vmem>>, vector<512x128xf32>
    tpu.vector_store %arg7[%c0_6, %c0_7], %7 {strides = array<i32>} : memref<512x128xf32, #tpu.memory_space<vmem>>, vector<512x128xf32>,
    %c0_i32_8 = arith.constant 0 : i32
    %9 = arith.cmpi eq, %arg2, %c0_i32_8 : i32
    %10 = arith.extui %9 : i1 to i32
    %c0_i32_9 = arith.constant 0 : i32
    %11 = arith.cmpi ne, %10, %c0_i32_9 : i32
    scf.if %11 {
      %c0_10 = arith.constant 0 : index
      %c0_11 = arith.constant 0 : index
      %12 = vector.load %arg7[%c0_10, %c0_11] : memref<512x128xf32, #tpu.memory_space<vmem>>, vector<512x128xf32>
      %13 = arith.truncf %12 : vector<512x128xf32> to vector<512x128xbf16>
      %c0_12 = arith.constant 0 : index
      %c0_13 = arith.constant 0 : index
      %14 = vector.load %arg5[%c0_12, %c0_13] : memref<512x128xbf16, #tpu.memory_space<vmem>>, vector<512x128xbf16>
      tpu.vector_store %arg5[%c0_12, %c0_13], %13 {strides = array<i32>} : memref<512x128xbf16, #tpu.memory_space<vmem>>, vector<512x128xbf16>,
      %cst_14 = arith.constant dense<0.000000e+00> : vector<128xf32>
      %15 = vector.multi_reduction <add>, %12, %cst_14 [0] : vector<512x128xf32> to vector<128xf32>
      %16 = vector.shape_cast %15 : vector<128xf32> to vector<1x128xf32>
      %c0_15 = arith.constant 0 : index
      %c0_16 = arith.constant 0 : index
      %17 = vector.load %arg6[%c0_15, %c0_16] : memref<8x128xf32, #tpu.memory_space<vmem>>, vector<1x128xf32>
      tpu.vector_store %arg6[%c0_15, %c0_16], %16 {strides = array<i32>} : memref<8x128xf32, #tpu.memory_space<vmem>>, vector<1x128xf32>,
      %18 = arith.mulf %12, %12 : vector<512x128xf32>
      %cst_17 = arith.constant dense<0.000000e+00> : vector<128xf32>
      %19 = vector.multi_reduction <add>, %18, %cst_17 [0] : vector<512x128xf32> to vector<128xf32>
      %20 = vector.shape_cast %19 : vector<128xf32> to vector<1x128xf32>
      %c1 = arith.constant 1 : index
      %c0_18 = arith.constant 0 : index
      %21 = vector.load %arg6[%c1, %c0_18] : memref<8x128xf32, #tpu.memory_space<vmem>>, vector<1x128xf32>
      tpu.vector_store %arg6[%c1, %c0_18], %20 {strides = array<i32>} : memref<8x128xf32, #tpu.memory_space<vmem>>, vector<1x128xf32>,
    } else {
    }
    return
  }
  func.func @transform_0(%arg0: i32, %arg1: i32, %arg2: i32) -> (i32, i32) {
    %c0_i32 = arith.constant 0 : i32
    return %arg0, %arg2 : i32, i32
  }
  func.func @transform_1(%arg0: i32, %arg1: i32, %arg2: i32) -> (i32, i32) {
    %c0_i32 = arith.constant 0 : i32
    return %arg2, %arg1 : i32, i32
  }
  func.func @transform_2(%arg0: i32, %arg1: i32, %arg2: i32) -> (i32, i32) {
    %c0_i32 = arith.constant 0 : i32
    return %arg0, %arg1 : i32, i32
  }
  func.func @transform_3(%arg0: i32, %arg1: i32, %arg2: i32) -> (i32, i32) {
    %c0_i32 = arith.constant 0 : i32
    return %arg0, %arg1 : i32, i32
  }
}

</mosaic_0001>

<llo_original>
// kernel: tpu_custom_call.1
$region0: #{tpu_custom_call.1}
  #allocation0 [shape = 'u32[]', space=smem, size = 0x4, offset = 0x4, fixed_abs, tag = 'smem constant byte address 0x4 - core index']
  #allocation1 [shape = 'u32[144,128]{1,0:T(1,128)}', space=vmem, size = 0x12000, scoped, tag = 'internal scratch']
  #allocation2 [shape = 'f32[512,128]{1,0:T(8,128)}', space=vmem, size = 0x40000, scoped, tag = 'scratch operand']
  %s0 = inlined_call_operand.hbm [shape: bf16[2048,128], index: 0, kind: input, shape index: {}]
  %s1 = inlined_call_operand.hbm [shape: bf16[128,128], index: 1, kind: input, shape index: {}]
  %s2 = inlined_call_operand.hbm [shape: bf16[2048,128], index: 2, kind: output, shape index: {0}]
  %s3 = inlined_call_operand.hbm [shape: f32[32,128], index: 3, kind: output, shape index: {1}]
  %4 = xla_tuple %s2, %s3
  %s5 = sld [smem:[#allocation0]]
  $region65: #{tpu_custom_call.1} parent=0
    _
  %s7 = ssub.s32 1, %s5
  %s8 = scalar_select 0, %s7, %s5
  $region1: #{tpu_custom_call.1} parent=0
    #allocation3 [shape = 'u8[262144]{0}', space=vmem, size = 0x40000, scoped, tag = 'input window, operand 0']
    #allocation4 [shape = 's32[2]{0}', space=sflag, size = 0x8, scoped, tag = 'scoped memory for tpu_custom_call.1']
    #allocation5 [shape = 's32[2]{0}', space=sflag, size = 0x8, scoped, tag = 'scoped memory for tpu_custom_call.1']
    #allocation6 [shape = 'u8[32768]{0}', space=vmem, size = 0x8000, scoped, tag = 'input window, operand 1, single buffered']
    #allocation7 [shape = 's32[1]{0}', space=sflag, size = 0x4, scoped, tag = 'scoped memory for tpu_custom_call.1']
    #allocation8 [shape = 'u8[262144]{0}', space=vmem, size = 0x40000, scoped, tag = 'output window, operand 0']
    #allocation9 [shape = 'u8[8192]{0}', space=vmem, size = 0x2000, scoped, tag = 'output window, operand 1']
    #allocation10 [shape = 's32[2]{0}', space=sflag, size = 0x8, scoped, tag = 'scoped memory for tpu_custom_call.1']
    %9 = vsyncpa [#allocation4], 0
    %s10 = scalar_lea.sflag [#allocation4], 1
    %11 = vsyncpa %s10, 0
    %12 = vsyncpa [#allocation7], 0
    %13 = vsyncpa [#allocation5], 0
    %s14 = scalar_lea.sflag [#allocation5], 1
    %15 = vsyncpa %s14, 0
    %16 = vsyncpa [#allocation10], 0
    %s17 = scalar_lea.sflag [#allocation10], 1
    %18 = vsyncpa %s17, 0
    loop: start=0, step=1, limit=6
    $region2: #{tpu_custom_call.1} parent=1 // loop_pre_header
      _
    $region3: #{tpu_custom_call.1} parent=1 // loop_header
      %s20 = sphi 0, %s24
      %p21 = scmp.ge.s32.totalorder %s20, 6
      %s27 = sphi 0, %s46
      %s28 = sphi 0, %s42
      %s29 = sphi 0, %s38
      %s30 = sphi 0, %s27
      %s31 = sphi 0, %s28
      %s32 = sphi 0, %s29
      %s33 = sphi 0, %s30
      %s34 = sphi 0, %s31
      %s35 = sphi 0, %s32
      %s51 = sphi 0, %s53
      %s54 = sphi 0, %s51
      %s55 = sphi 0, %s54
      %s71 = sphi 0, %s55
      %s79 = sphi 0, %s81
      %s82 = sphi 0, %s79
      %s83 = sphi 0, %s82
      %s99 = sphi 0, %s83
      %s107 = sphi 0, %s109
      %s110 = sphi 0, %s107
      %s111 = sphi 0, %s110
      %s127 = sphi 0, %s111
      %s135 = sphi 0, %s137
      %s138 = sphi 0, %s135
      %s139 = sphi 0, %s138
      %s155 = sphi 0, %s139
    $region4: #{tpu_custom_call.1} parent=1 // loop_header_branch
      %23 = sbr.rel (%p21) target = $region8
    $region5: #{tpu_custom_call.1} parent=1 // loop_body
      %s25 = ssub.s32 %s20, 1
      %s26 = ssub.s32 %s20, 2
      %s36 = sadd.s32 1, %s29
      %p37 = scmp.ge.s32.totalorder %s36, 1
      %s38 = scalar_select %p37, 0, %s36
      %s39 = sadd.s32 1, %s28
      %s40 = scalar_select %p37, %s39, %s28
      %p41 = scmp.ge.s32.totalorder %s40, 1
      %s42 = scalar_select %p41, 0, %s40
      %s43 = sadd.s32 1, %s27
      %s44 = scalar_select %p41, %s43, %s27
      %p45 = scmp.ge.s32.totalorder %s44, 4
      %s46 = scalar_select %p45, 0, %s44
      %s47 = ssub.s32 %s27, %s46
      %s48 = ssub.s32 %s29, %s38
      %s49 = sor.u32 %s47, %s48
      %p50 = scmp.eq.s32.totalorder %s49, 0
      %s52 = sadd.s32 %s51, 1
      %s53 = scalar_select %p50, %s51, %s52
      %p56 = pneg %p50
      %p57 = scmp.eq.s32.totalorder %s20, 3
      %p58 = por %p56, %p57
      %p59 = scmp.ne.s32.totalorder %s51, %s54
      %p60 = scmp.eq.s32.totalorder %s20, 0
      %p61 = por %p59, %p60
      %p62 = scmp.ne.s32.totalorder %s51, %s54
      %p63 = scmp.eq.s32.totalorder %s25, 3
      %p64 = por %p62, %p63
      %p65 = scmp.ne.s32.totalorder %s54, %s55
      %p66 = scmp.eq.s32.totalorder %s25, 0
      %p67 = por %p65, %p66
      %p68 = scmp.ne.s32.totalorder %s54, %s55
      %p69 = scmp.eq.s32.totalorder %s26, 3
      %p70 = por %p68, %p69
      %p72 = scmp.ne.s32.totalorder %s55, %s71
      %p73 = scmp.eq.s32.totalorder %s26, 0
      %p74 = por %p72, %p73
      %s75 = ssub.s32 %s29, %s38
      %s76 = ssub.s32 %s28, %s42
      %s77 = sor.u32 %s75, %s76
      %p78 = scmp.eq.s32.totalorder %s77, 0
      %s80 = sadd.s32 %s79, 1
      %s81 = scalar_select %p78, %s79, %s80
      %p84 = pneg %p78
      %p85 = scmp.eq.s32.totalorder %s20, 3
      %p86 = por %p84, %p85
      %p87 = scmp.ne.s32.totalorder %s79, %s82
      %p88 = scmp.eq.s32.totalorder %s20, 0
      %p89 = por %p87, %p88
      %p90 = scmp.ne.s32.totalorder %s79, %s82
      %p91 = scmp.eq.s32.totalorder %s25, 3
      %p92 = por %p90, %p91
      %p93 = scmp.ne.s32.totalorder %s82, %s83
      %p94 = scmp.eq.s32.totalorder %s25, 0
      %p95 = por %p93, %p94
      %p96 = scmp.ne.s32.totalorder %s82, %s83
      %p97 = scmp.eq.s32.totalorder %s26, 3
      %p98 = por %p96, %p97
      %p100 = scmp.ne.s32.totalorder %s83, %s99
      %p101 = scmp.eq.s32.totalorder %s26, 0
      %p102 = por %p100, %p101
      %s103 = ssub.s32 %s27, %s46
      %s104 = ssub.s32 %s28, %s42
      %s105 = sor.u32 %s103, %s104
      %p106 = scmp.eq.s32.totalorder %s105, 0
      %s108 = sadd.s32 %s107, 1
      %s109 = scalar_select %p106, %s107, %s108
      %p112 = pneg %p106
      %p113 = scmp.eq.s32.totalorder %s20, 3
      %p114 = por %p112, %p113
      %p115 = scmp.ne.s32.totalorder %s107, %s110
      %p116 = scmp.eq.s32.totalorder %s20, 0
      %p117 = por %p115, %p116
      %p118 = scmp.ne.s32.totalorder %s107, %s110
      %p119 = scmp.eq.s32.totalorder %s25, 3
      %p120 = por %p118, %p119
      %p121 = scmp.ne.s32.totalorder %s110, %s111
      %p122 = scmp.eq.s32.totalorder %s25, 0
      %p123 = por %p121, %p122
      %p124 = scmp.ne.s32.totalorder %s110, %s111
      %p125 = scmp.eq.s32.totalorder %s26, 3
      %p126 = por %p124, %p125
      %p128 = scmp.ne.s32.totalorder %s111, %s127
      %p129 = scmp.eq.s32.totalorder %s26, 0
      %p130 = por %p128, %p129
      %s131 = ssub.s32 %s27, %s46
      %s132 = ssub.s32 %s28, %s42
      %s133 = sor.u32 %s131, %s132
      %p134 = scmp.eq.s32.totalorder %s133, 0
      %s136 = sadd.s32 %s135, 1
      %s137 = scalar_select %p134, %s135, %s136
      %p140 = pneg %p134
      %p141 = scmp.eq.s32.totalorder %s20, 3
      %p142 = por %p140, %p141
      %p143 = scmp.ne.s32.totalorder %s135, %s138
      %p144 = scmp.eq.s32.totalorder %s20, 0
      %p145 = por %p143, %p144
      %p146 = scmp.ne.s32.totalorder %s135, %s138
      %p147 = scmp.eq.s32.totalorder %s25, 3
      %p148 = por %p146, %p147
      %p149 = scmp.ne.s32.totalorder %s138, %s139
      %p150 = scmp.eq.s32.totalorder %s25, 0
      %p151 = por %p149, %p150
      %p152 = scmp.ne.s32.totalorder %s138, %s139
      %p153 = scmp.eq.s32.totalorder %s26, 3
      %p154 = por %p152, %p153
      %p156 = scmp.ne.s32.totalorder %s139, %s155
      %p157 = scmp.eq.s32.totalorder %s26, 0
      %p158 = por %p156, %p157
      %p159 = scmp.le.s32.totalorder 1, %s20
      %p160 = scmp.lt.s32.totalorder %s20, 5
      %p161 = pnand %p159, %p160
      %p162 = pneg %p161
      // Predicated region
      $region9: #{tpu_custom_call.1} parent=5 // pred_check
        _
      $region10: #{tpu_custom_call.1} parent=5 // pred_check_branch
        %164 = sbr.rel (%p161) target = $region12
      $region11: #{tpu_custom_call.1} parent=5 // pred_region
        %s165 = ssub.s32 %s20, 1
        // Predicated region
        $region13: #{tpu_custom_call.1} parent=11 // pred_check
          %p166 = pneg %p95
        $region14: #{tpu_custom_call.1} parent=11 // pred_check_branch
          %168 = sbr.rel (%p166) target = $region16
        $region15: #{tpu_custom_call.1} parent=11 // pred_region
          %s169 = smul.u32 16, %s32
          %s171 = ssub.s32 1024, 1024
          %172 = vsyncadd [#allocation7], %s171
          %s173 = sadd.s32 %s31, %s169
          %s174 = smul.addr %s173, 64
          %s175 = scalar_lea.hbm %s1, %s174
          %s176 = sshll.u32 [#allocation6], 4
          %s177 = int_to_ptr.vmem [resolvable:$true] %s176
          %182 = dma.hbm_to_vmem [thread:$0]  %s175, 1024, %s177, [#allocation7], 64, 64, 4
        $region16: #{tpu_custom_call.1} parent=11 // pred_fallthru
          _
      $region12: #{tpu_custom_call.1} parent=5 // pred_fallthru
        _
      %p183 = scmp.lt.s32.totalorder %s20, 4
      // Predicated region
      $region17: #{tpu_custom_call.1} parent=5 // pred_check
        %p184 = pneg %p183
      $region18: #{tpu_custom_call.1} parent=5 // pred_check_branch
        %186 = sbr.rel (%p184) target = $region20
      $region19: #{tpu_custom_call.1} parent=5 // pred_region
        // Predicated region
        $region21: #{tpu_custom_call.1} parent=19 // pred_check
          %p187 = pneg %p61
        $region22: #{tpu_custom_call.1} parent=19 // pred_check_branch
          %189 = sbr.rel (%p187) target = $region24
        $region23: #{tpu_custom_call.1} parent=19 // pred_region
          %s190 = sand.u32 %s51, 1
          %s191 = scalar_lea.sflag [#allocation4], %s190
          %s192 = sand.u32 %s51, 1
          %s193 = smul.addr %s192, 256
          %s194 = scalar_lea.vmem [#allocation3], %s193
          %s195 = smul.u32 64, %s27
          %s197 = ssub.s32 4096, 4096
          %198 = vsyncadd %s191, %s197
          %s199 = sadd.s32 %s29, %s195
          %s200 = smul.addr %s199, 64
          %s201 = scalar_lea.hbm %s0, %s200
          %s202 = sshll.u32 %s194, 4
          %s203 = int_to_ptr.vmem [resolvable:$true] %s202
          %208 = dma.hbm_to_vmem [thread:$0]  %s201, 4096, %s203, %s191, 64, 64, 4
        $region24: #{tpu_custom_call.1} parent=19 // pred_fallthru
          _
      $region20: #{tpu_custom_call.1} parent=5 // pred_fallthru
        _
      %p209 = scmp.le.s32.totalorder 1, %s20
      %p210 = scmp.lt.s32.totalorder %s20, 5
      %p211 = pnand %p209, %p210
      %p212 = pneg %p211
      // Predicated region
      $region25: #{tpu_custom_call.1} parent=5 // pred_check
        _
      $region26: #{tpu_custom_call.1} parent=5 // pred_check_branch
        %214 = sbr.rel (%p211) target = $region28
      $region27: #{tpu_custom_call.1} parent=5 // pred_region
        %s215 = ssub.s32 %s20, 1
        %s216 = sand.u32 %s54, 1
        %s217 = scalar_lea.sflag [#allocation4], %s216
        %s218 = sand.u32 %s54, 1
        %s219 = smul.addr %s218, 256
        %s220 = scalar_lea.vmem [#allocation3], %s219
        // Predicated region
        $region29: #{tpu_custom_call.1} parent=27 // pred_check
          %p221 = pneg %p67
        $region30: #{tpu_custom_call.1} parent=27 // pred_check_branch
          %223 = sbr.rel (%p221) target = $region32
        $region31: #{tpu_custom_call.1} parent=27 // pred_region
          %224 = dma.done %s217, 4096
        $region32: #{tpu_custom_call.1} parent=27 // pred_fallthru
          _
        // Predicated region
        $region33: #{tpu_custom_call.1} parent=27 // pred_check
          %p225 = pneg %p95
        $region34: #{tpu_custom_call.1} parent=27 // pred_check_branch
          %227 = sbr.rel (%p225) target = $region36
        $region35: #{tpu_custom_call.1} parent=27 // pred_region
          %228 = dma.done [#allocation7], 1024
        $region36: #{tpu_custom_call.1} parent=27 // pred_fallthru
          _
        %s229 = sand.u32 %s54, 1
        %s230 = scalar_lea.sflag [#allocation4], %s229
        %s231 = sand.u32 %s54, 1
        %s232 = smul.addr %s231, 256
        %s233 = scalar_lea.vmem [#allocation3], %s232
        %p234 = pneg %p67
        %p235 = pneg %p64
        %p236 = pneg %p95
        %p237 = pneg %p92
        %p238 = pneg %p123
        %p239 = pneg %p120
        %s240 = sand.u32 %s110, 1
        %s241 = scalar_lea.sflag [#allocation5], %s240
        %s242 = sand.u32 %s110, 1
        %s243 = smul.addr %s242, 256
        %s244 = scalar_lea.vmem [#allocation8], %s243
        %p245 = pneg %p151
        %p246 = pneg %p148
        %s247 = sand.u32 %s138, 1
        %s248 = scalar_lea.sflag [#allocation10], %s247
        %s249 = sand.u32 %s138, 1
        %s250 = smul.addr %s249, 8
        %s251 = scalar_lea.vmem [#allocation9], %s250
        %s252 = smul.u32 64, %s30
        %s253 = smul.u32 16, %s32
        %s254 = smul.u32 64, %s30
        %p256 = scmp.eq.s32.totalorder %s32, 0
        // Predicated region
        $region37: #{tpu_custom_call.1} parent=27 // pred_check
          %p257 = pneg %p256
        $region38: #{tpu_custom_call.1} parent=27 // pred_check_branch
          %259 = sbr.rel (%p257) target = $region40
        $region39: #{tpu_custom_call.1} parent=27 // pred_region
          %260 = vst [vmem:[#allocation2] sm:$0xff] 0.0
          %261 = vst [vmem:[#allocation2 + $0x8] sm:$0xff] 0.0
          %262 = vst [vmem:[#allocation2 + $0x10] sm:$0xff] 0.0
          %263 = vst [vmem:[#allocation2 + $0x18] sm:$0xff] 0.0
          %264 = vst [vmem:[#allocation2 + $0x20] sm:$0xff] 0.0
          %265 = vst [vmem:[#allocation2 + $0x28] sm:$0xff] 0.0
          %266 = vst [vmem:[#allocation2 + $0x30] sm:$0xff] 0.0
          %267 = vst [vmem:[#allocation2 + $0x38] sm:$0xff] 0.0
          %268 = vst [vmem:[#allocation2 + $0x40] sm:$0xff] 0.0
          %269 = vst [vmem:[#allocation2 + $0x48] sm:$0xff] 0.0
          %270 = vst [vmem:[#allocation2 + $0x50] sm:$0xff] 0.0
          %271 = vst [vmem:[#allocation2 + $0x58] sm:$0xff] 0.0
          %272 = vst [vmem:[#allocation2 + $0x60] sm:$0xff] 0.0
          %273 = vst [vmem:[#allocation2 + $0x68] sm:$0xff] 0.0
          %274 = vst [vmem:[#allocation2 + $0x70] sm:$0xff] 0.0
          %275 = vst [vmem:[#allocation2 + $0x78] sm:$0xff] 0.0
          %276 = vst [vmem:[#allocation2 + $0x80] sm:$0xff] 0.0
          %277 = vst [vmem:[#allocation2 + $0x88] sm:$0xff] 0.0
          %278 = vst [vmem:[#allocation2 + $0x90] sm:$0xff] 0.0
          %279 = vst [vmem:[#allocation2 + $0x98] sm:$0xff] 0.0
          %280 = vst [vmem:[#allocation2 + $0xa0] sm:$0xff] 0.0
          %281 = vst [vmem:[#allocation2 + $0xa8] sm:$0xff] 0.0
          %282 = vst [vmem:[#allocation2 + $0xb0] sm:$0xff] 0.0
          %283 = vst [vmem:[#allocation2 + $0xb8] sm:$0xff] 0.0
          %284 = vst [vmem:[#allocation2 + $0xc0] sm:$0xff] 0.0
          %285 = vst [vmem:[#allocation2 + $0xc8] sm:$0xff] 0.0
          %286 = vst [vmem:[#allocation2 + $0xd0] sm:$0xff] 0.0
          %287 = vst [vmem:[#allocation2 + $0xd8] sm:$0xff] 0.0
          %288 = vst [vmem:[#allocation2 + $0xe0] sm:$0xff] 0.0
          %289 = vst [vmem:[#allocation2 + $0xe8] sm:$0xff] 0.0
          %290 = vst [vmem:[#allocation2 + $0xf0] sm:$0xff] 0.0
          %291 = vst [vmem:[#allocation2 + $0xf8] sm:$0xff] 0.0
          %292 = vst [vmem:[#allocation2 + $0x100] sm:$0xff] 0.0
          %293 = vst [vmem:[#allocation2 + $0x108] sm:$0xff] 0.0
          %294 = vst [vmem:[#allocation2 + $0x110] sm:$0xff] 0.0
          %295 = vst [vmem:[#allocation2 + $0x118] sm:$0xff] 0.0
          %296 = vst [vmem:[#allocation2 + $0x120] sm:$0xff] 0.0
          %297 = vst [vmem:[#allocation2 + $0x128] sm:$0xff] 0.0
          %298 = vst [vmem:[#allocation2 + $0x130] sm:$0xff] 0.0
          %299 = vst [vmem:[#allocation2 + $0x138] sm:$0xff] 0.0
          %300 = vst [vmem:[#allocation2 + $0x140] sm:$0xff] 0.0
          %301 = vst [vmem:[#allocation2 + $0x148] sm:$0xff] 0.0
          %302 = vst [vmem:[#allocation2 + $0x150] sm:$0xff] 0.0
          %303 = vst [vmem:[#allocation2 + $0x158] sm:$0xff] 0.0
          %304 = vst [vmem:[#allocation2 + $0x160] sm:$0xff] 0.0
          %305 = vst [vmem:[#allocation2 + $0x168] sm:$0xff] 0.0
          %306 = vst [vmem:[#allocation2 + $0x170] sm:$0xff] 0.0
          %307 = vst [vmem:[#allocation2 + $0x178] sm:$0xff] 0.0
          %308 = vst [vmem:[#allocation2 + $0x180] sm:$0xff] 0.0
          %309 = vst [vmem:[#allocation2 + $0x188] sm:$0xff] 0.0
          %310 = vst [vmem:[#allocation2 + $0x190] sm:$0xff] 0.0
          %311 = vst [vmem:[#allocation2 + $0x198] sm:$0xff] 0.0
          %312 = vst [vmem:[#allocation2 + $0x1a0] sm:$0xff] 0.0
          %313 = vst [vmem:[#allocation2 + $0x1a8] sm:$0xff] 0.0
          %314 = vst [vmem:[#allocation2 + $0x1b0] sm:$0xff] 0.0
          %315 = vst [vmem:[#allocation2 + $0x1b8] sm:$0xff] 0.0
          %316 = vst [vmem:[#allocation2 + $0x1c0] sm:$0xff] 0.0
          %317 = vst [vmem:[#allocation2 + $0x1c8] sm:$0xff] 0.0
          %318 = vst [vmem:[#allocation2 + $0x1d0] sm:$0xff] 0.0
          %319 = vst [vmem:[#allocation2 + $0x1d8] sm:$0xff] 0.0
          %320 = vst [vmem:[#allocation2 + $0x1e0] sm:$0xff] 0.0
          %321 = vst [vmem:[#allocation2 + $0x1e8] sm:$0xff] 0.0
          %322 = vst [vmem:[#allocation2 + $0x1f0] sm:$0xff] 0.0
          %323 = vst [vmem:[#allocation2 + $0x1f8] sm:$0xff] 0.0
          %324 = vst [vmem:[%s251] sm:$0xff] 0.0
        $region40: #{tpu_custom_call.1} parent=27 // pred_fallthru
          _
        %v325 = vld [vmem:[#allocation2] sm:$0xff]
        %v326 = vld [vmem:[#allocation2 + $0x8] sm:$0xff]
        %v327 = vld [vmem:[#allocation2 + $0x10] sm:$0xff]
        %v328 = vld [vmem:[#allocation2 + $0x18] sm:$0xff]
        %v329 = vld [vmem:[#allocation2 + $0x20] sm:$0xff]
        %v330 = vld [vmem:[#allocation2 + $0x28] sm:$0xff]
        %v331 = vld [vmem:[#allocation2 + $0x30] sm:$0xff]
        %v332 = vld [vmem:[#allocation2 + $0x38] sm:$0xff]
        %v333 = vld [vmem:[#allocation2 + $0x40] sm:$0xff]
        %v334 = vld [vmem:[#allocation2 + $0x48] sm:$0xff]
        %v335 = vld [vmem:[#allocation2 + $0x50] sm:$0xff]
        %v336 = vld [vmem:[#allocation2 + $0x58] sm:$0xff]
        %v337 = vld [vmem:[#allocation2 + $0x60] sm:$0xff]
        %v338 = vld [vmem:[#allocation2 + $0x68] sm:$0xff]
        %v339 = vld [vmem:[#allocation2 + $0x70] sm:$0xff]
        %v340 = vld [vmem:[#allocation2 + $0x78] sm:$0xff]
        %v341 = vld [vmem:[#allocation2 + $0x80] sm:$0xff]
        %v342 = vld [vmem:[#allocation2 + $0x88] sm:$0xff]
        %v343 = vld [vmem:[#allocation2 + $0x90] sm:$0xff]
        %v344 = vld [vmem:[#allocation2 + $0x98] sm:$0xff]
        %v345 = vld [vmem:[#allocation2 + $0xa0] sm:$0xff]
        %v346 = vld [vmem:[#allocation2 + $0xa8] sm:$0xff]
        %v347 = vld [vmem:[#allocation2 + $0xb0] sm:$0xff]
        %v348 = vld [vmem:[#allocation2 + $0xb8] sm:$0xff]
        %v349 = vld [vmem:[#allocation2 + $0xc0] sm:$0xff]
        %v350 = vld [vmem:[#allocation2 + $0xc8] sm:$0xff]
        %v351 = vld [vmem:[#allocation2 + $0xd0] sm:$0xff]
        %v352 = vld [vmem:[#allocation2 + $0xd8] sm:$0xff]
        %v353 = vld [vmem:[#allocation2 + $0xe0] sm:$0xff]
        %v354 = vld [vmem:[#allocation2 + $0xe8] sm:$0xff]
        %v355 = vld [vmem:[#allocation2 + $0xf0] sm:$0xff]
        %v356 = vld [vmem:[#allocation2 + $0xf8] sm:$0xff]
        %v357 = vld [vmem:[#allocation2 + $0x100] sm:$0xff]
        %v358 = vld [vmem:[#allocation2 + $0x108] sm:$0xff]
        %v359 = vld [vmem:[#allocation2 + $0x110] sm:$0xff]
        %v360 = vld [vmem:[#allocation2 + $0x118] sm:$0xff]
        %v361 = vld [vmem:[#allocation2 + $0x120] sm:$0xff]
        %v362 = vld [vmem:[#allocation2 + $0x128] sm:$0xff]
        %v363 = vld [vmem:[#allocation2 + $0x130] sm:$0xff]
        %v364 = vld [vmem:[#allocation2 + $0x138] sm:$0xff]
        %v365 = vld [vmem:[#allocation2 + $0x140] sm:$0xff]
        %v366 = vld [vmem:[#allocation2 + $0x148] sm:$0xff]
        %v367 = vld [vmem:[#allocation2 + $0x150] sm:$0xff]
        %v368 = vld [vmem:[#allocation2 + $0x158] sm:$0xff]
        %v369 = vld [vmem:[#allocation2 + $0x160] sm:$0xff]
        %v370 = vld [vmem:[#allocation2 + $0x168] sm:$0xff]
        %v371 = vld [vmem:[#allocation2 + $0x170] sm:$0xff]
        %v372 = vld [vmem:[#allocation2 + $0x178] sm:$0xff]
        %v373 = vld [vmem:[#allocation2 + $0x180] sm:$0xff]
        %v374 = vld [vmem:[#allocation2 + $0x188] sm:$0xff]
        %v375 = vld [vmem:[#allocation2 + $0x190] sm:$0xff]
        %v376 = vld [vmem:[#allocation2 + $0x198] sm:$0xff]
        %v377 = vld [vmem:[#allocation2 + $0x1a0] sm:$0xff]
        %v378 = vld [vmem:[#allocation2 + $0x1a8] sm:$0xff]
        %v379 = vld [vmem:[#allocation2 + $0x1b0] sm:$0xff]
        %v380 = vld [vmem:[#allocation2 + $0x1b8] sm:$0xff]
        %v381 = vld [vmem:[#allocation2 + $0x1c0] sm:$0xff]
        %v382 = vld [vmem:[#allocation2 + $0x1c8] sm:$0xff]
        %v383 = vld [vmem:[#allocation2 + $0x1d0] sm:$0xff]
        %v384 = vld [vmem:[#allocation2 + $0x1d8] sm:$0xff]
        %v385 = vld [vmem:[#allocation2 + $0x1e0] sm:$0xff]
        %v386 = vld [vmem:[#allocation2 + $0x1e8] sm:$0xff]
        %v387 = vld [vmem:[#allocation2 + $0x1f0] sm:$0xff]
        %v388 = vld [vmem:[#allocation2 + $0x1f8] sm:$0xff]
        %v389 = vld [vmem:[%s220] sm:$0xf]
        %v390 = vld [vmem:[%s220 + $0x4] sm:$0xf]
        %v391 = vld [vmem:[%s220 + $0x8] sm:$0xf]
        %v392 = vld [vmem:[%s220 + $0xc] sm:$0xf]
        %v393 = vld [vmem:[%s220 + $0x10] sm:$0xf]
        %v394 = vld [vmem:[%s220 + $0x14] sm:$0xf]
        %v395 = vld [vmem:[%s220 + $0x18] sm:$0xf]
        %v396 = vld [vmem:[%s220 + $0x1c] sm:$0xf]
        %v397 = vld [vmem:[%s220 + $0x20] sm:$0xf]
        %v398 = vld [vmem:[%s220 + $0x24] sm:$0xf]
        %v399 = vld [vmem:[%s220 + $0x28] sm:$0xf]
        %v400 = vld [vmem:[%s220 + $0x2c] sm:$0xf]
        %v401 = vld [vmem:[%s220 + $0x30] sm:$0xf]
        %v402 = vld [vmem:[%s220 + $0x34] sm:$0xf]
        %v403 = vld [vmem:[%s220 + $0x38] sm:$0xf]
        %v404 = vld [vmem:[%s220 + $0x3c] sm:$0xf]
        %v405 = vld [vmem:[%s220 + $0x40] sm:$0xf]
        %v406 = vld [vmem:[%s220 + $0x44] sm:$0xf]
        %v407 = vld [vmem:[%s220 + $0x48] sm:$0xf]
        %v408 = vld [vmem:[%s220 + $0x4c] sm:$0xf]
        %v409 = vld [vmem:[%s220 + $0x50] sm:$0xf]
        %v410 = vld [vmem:[%s220 + $0x54] sm:$0xf]
        %v411 = vld [vmem:[%s220 + $0x58] sm:$0xf]
        %v412 = vld [vmem:[%s220 + $0x5c] sm:$0xf]
        %v413 = vld [vmem:[%s220 + $0x60] sm:$0xf]
        %v414 = vld [vmem:[%s220 + $0x64] sm:$0xf]
        %v415 = vld [vmem:[%s220 + $0x68] sm:$0xf]
        %v416 = vld [vmem:[%s220 + $0x6c] sm:$0xf]
        %v417 = vld [vmem:[%s220 + $0x70] sm:$0xf]
        %v418 = vld [vmem:[%s220 + $0x74] sm:$0xf]
        %v419 = vld [vmem:[%s220 + $0x78] sm:$0xf]
        %v420 = vld [vmem:[%s220 + $0x7c] sm:$0xf]
        %v421 = vld [vmem:[%s220 + $0x80] sm:$0xf]
        %v422 = vld [vmem:[%s220 + $0x84] sm:$0xf]
        %v423 = vld [vmem:[%s220 + $0x88] sm:$0xf]
        %v424 = vld [vmem:[%s220 + $0x8c] sm:$0xf]
        %v425 = vld [vmem:[%s220 + $0x90] sm:$0xf]
        %v426 = vld [vmem:[%s220 + $0x94] sm:$0xf]
        %v427 = vld [vmem:[%s220 + $0x98] sm:$0xf]
        %v428 = vld [vmem:[%s220 + $0x9c] sm:$0xf]
        %v429 = vld [vmem:[%s220 + $0xa0] sm:$0xf]
        %v430 = vld [vmem:[%s220 + $0xa4] sm:$0xf]
        %v431 = vld [vmem:[%s220 + $0xa8] sm:$0xf]
        %v432 = vld [vmem:[%s220 + $0xac] sm:$0xf]
        %v433 = vld [vmem:[%s220 + $0xb0] sm:$0xf]
        %v434 = vld [vmem:[%s220 + $0xb4] sm:$0xf]
        %v435 = vld [vmem:[%s220 + $0xb8] sm:$0xf]
        %v436 = vld [vmem:[%s220 + $0xbc] sm:$0xf]
        %v437 = vld [vmem:[%s220 + $0xc0] sm:$0xf]
        %v438 = vld [vmem:[%s220 + $0xc4] sm:$0xf]
        %v439 = vld [vmem:[%s220 + $0xc8] sm:$0xf]
        %v440 = vld [vmem:[%s220 + $0xcc] sm:$0xf]
        %v441 = vld [vmem:[%s220 + $0xd0] sm:$0xf]
        %v442 = vld [vmem:[%s220 + $0xd4] sm:$0xf]
        %v443 = vld [vmem:[%s220 + $0xd8] sm:$0xf]
        %v444 = vld [vmem:[%s220 + $0xdc] sm:$0xf]
        %v445 = vld [vmem:[%s220 + $0xe0] sm:$0xf]
        %v446 = vld [vmem:[%s220 + $0xe4] sm:$0xf]
        %v447 = vld [vmem:[%s220 + $0xe8] sm:$0xf]
        %v448 = vld [vmem:[%s220 + $0xec] sm:$0xf]
        %v449 = vld [vmem:[%s220 + $0xf0] sm:$0xf]
        %v450 = vld [vmem:[%s220 + $0xf4] sm:$0xf]
        %v451 = vld [vmem:[%s220 + $0xf8] sm:$0xf]
        %v452 = vld [vmem:[%s220 + $0xfc] sm:$0xf]
        %v453 = vld [vmem:[#allocation6] sm:$0xf]
        %v454 = vld [vmem:[#allocation6 + $0x4] sm:$0xf]
        %v455 = vld [vmem:[#allocation6 + $0x8] sm:$0xf]
        %v456 = vld [vmem:[#allocation6 + $0xc] sm:$0xf]
        %v457 = vld [vmem:[#allocation6 + $0x10] sm:$0xf]
        %v458 = vld [vmem:[#allocation6 + $0x14] sm:$0xf]
        %v459 = vld [vmem:[#allocation6 + $0x18] sm:$0xf]
        %v460 = vld [vmem:[#allocation6 + $0x1c] sm:$0xf]
        %v461 = vld [vmem:[#allocation6 + $0x20] sm:$0xf]
        %v462 = vld [vmem:[#allocation6 + $0x24] sm:$0xf]
        %v463 = vld [vmem:[#allocation6 + $0x28] sm:$0xf]
        %v464 = vld [vmem:[#allocation6 + $0x2c] sm:$0xf]
        %v465 = vld [vmem:[#allocation6 + $0x30] sm:$0xf]
        %v466 = vld [vmem:[#allocation6 + $0x34] sm:$0xf]
        %v467 = vld [vmem:[#allocation6 + $0x38] sm:$0xf]
        %v468 = vld [vmem:[#allocation6 + $0x3c] sm:$0xf]
        %v533 = vunpack.c.l.b16 %v389
        %v534 = vunpack.c.l.b16 %v390
        %v535 = vunpack.c.l.b16 %v391
        %v536 = vunpack.c.l.b16 %v392
        %v537 = vunpack.c.l.b16 %v393
        %v538 = vunpack.c.l.b16 %v394
        %v539 = vunpack.c.l.b16 %v395
        %v540 = vunpack.c.l.b16 %v396
        %v541 = vunpack.c.l.b16 %v397
        %v542 = vunpack.c.l.b16 %v398
        %v543 = vunpack.c.l.b16 %v399
        %v544 = vunpack.c.l.b16 %v400
        %v545 = vunpack.c.l.b16 %v401
        %v546 = vunpack.c.l.b16 %v402
        %v547 = vunpack.c.l.b16 %v403
        %v548 = vunpack.c.l.b16 %v404
        %v549 = vunpack.c.l.b16 %v405
        %v550 = vunpack.c.l.b16 %v406
        %v551 = vunpack.c.l.b16 %v407
        %v552 = vunpack.c.l.b16 %v408
        %v553 = vunpack.c.l.b16 %v409
        %v554 = vunpack.c.l.b16 %v410
        %v555 = vunpack.c.l.b16 %v411
        %v556 = vunpack.c.l.b16 %v412
        %v557 = vunpack.c.l.b16 %v413
        %v558 = vunpack.c.l.b16 %v414
        %v559 = vunpack.c.l.b16 %v415
        %v560 = vunpack.c.l.b16 %v416
        %v561 = vunpack.c.l.b16 %v417
        %v562 = vunpack.c.l.b16 %v418
        %v563 = vunpack.c.l.b16 %v419
        %v564 = vunpack.c.l.b16 %v420
        %v565 = vunpack.c.l.b16 %v421
        %v566 = vunpack.c.l.b16 %v422
        %v567 = vunpack.c.l.b16 %v423
        %v568 = vunpack.c.l.b16 %v424
        %v569 = vunpack.c.l.b16 %v425
        %v570 = vunpack.c.l.b16 %v426
        %v571 = vunpack.c.l.b16 %v427
        %v572 = vunpack.c.l.b16 %v428
        %v573 = vunpack.c.l.b16 %v429
        %v574 = vunpack.c.l.b16 %v430
        %v575 = vunpack.c.l.b16 %v431
        %v576 = vunpack.c.l.b16 %v432
        %v577 = vunpack.c.l.b16 %v433
        %v578 = vunpack.c.l.b16 %v434
        %v579 = vunpack.c.l.b16 %v435
        %v580 = vunpack.c.l.b16 %v436
        %v581 = vunpack.c.l.b16 %v437
        %v582 = vunpack.c.l.b16 %v438
        %v583 = vunpack.c.l.b16 %v439
        %v584 = vunpack.c.l.b16 %v440
        %v585 = vunpack.c.l.b16 %v441
        %v586 = vunpack.c.l.b16 %v442
        %v587 = vunpack.c.l.b16 %v443
        %v588 = vunpack.c.l.b16 %v444
        %v589 = vunpack.c.l.b16 %v445
        %v590 = vunpack.c.l.b16 %v446
        %v591 = vunpack.c.l.b16 %v447
        %v592 = vunpack.c.l.b16 %v448
        %v593 = vunpack.c.l.b16 %v449
        %v594 = vunpack.c.l.b16 %v450
        %v595 = vunpack.c.l.b16 %v451
        %v596 = vunpack.c.l.b16 %v452
        %v597 = vpack.c.b16 %v534, %v533
        %v598 = vpack.c.b16 %v536, %v535
        %v599 = vpack.c.b16 %v538, %v537
        %v600 = vpack.c.b16 %v540, %v539
        %v601 = vpack.c.b16 %v542, %v541
        %v602 = vpack.c.b16 %v544, %v543
        %v603 = vpack.c.b16 %v546, %v545
        %v604 = vpack.c.b16 %v548, %v547
        %v605 = vpack.c.b16 %v550, %v549
        %v606 = vpack.c.b16 %v552, %v551
        %v607 = vpack.c.b16 %v554, %v553
        %v608 = vpack.c.b16 %v556, %v555
        %v609 = vpack.c.b16 %v558, %v557
        %v610 = vpack.c.b16 %v560, %v559
        %v611 = vpack.c.b16 %v562, %v561
        %v612 = vpack.c.b16 %v564, %v563
        %v613 = vpack.c.b16 %v566, %v565
        %v614 = vpack.c.b16 %v568, %v567
        %v615 = vpack.c.b16 %v570, %v569
        %v616 = vpack.c.b16 %v572, %v571
        %v617 = vpack.c.b16 %v574, %v573
        %v618 = vpack.c.b16 %v576, %v575
        %v619 = vpack.c.b16 %v578, %v577
        %v620 = vpack.c.b16 %v580, %v579
        %v621 = vpack.c.b16 %v582, %v581
        %v622 = vpack.c.b16 %v584, %v583
        %v623 = vpack.c.b16 %v586, %v585
        %v624 = vpack.c.b16 %v588, %v587
        %v625 = vpack.c.b16 %v590, %v589
        %v626 = vpack.c.b16 %v592, %v591
        %v627 = vpack.c.b16 %v594, %v593
        %v628 = vpack.c.b16 %v596, %v595
        %v677 = vunpack.c.l.b16 %v453
        %v678 = vunpack.c.l.b16 %v454
        %v679 = vunpack.c.l.b16 %v455
        %v680 = vunpack.c.l.b16 %v456
        %v681 = vunpack.c.l.b16 %v457
        %v682 = vunpack.c.l.b16 %v458
        %v683 = vunpack.c.l.b16 %v459
        %v684 = vunpack.c.l.b16 %v460
        %v685 = vunpack.c.l.b16 %v461
        %v686 = vunpack.c.l.b16 %v462
        %v687 = vunpack.c.l.b16 %v463
        %v688 = vunpack.c.l.b16 %v464
        %v689 = vunpack.c.l.b16 %v465
        %v690 = vunpack.c.l.b16 %v466
        %v691 = vunpack.c.l.b16 %v467
        %v692 = vunpack.c.l.b16 %v468
        %v693 = vpack.c.b16 %v678, %v677
        %v694 = vpack.c.b16 %v680, %v679
        %v695 = vpack.c.b16 %v682, %v681
        %v696 = vpack.c.b16 %v684, %v683
        %v697 = vpack.c.b16 %v686, %v685
        %v698 = vpack.c.b16 %v688, %v687
        %v699 = vpack.c.b16 %v690, %v689
        %v700 = vpack.c.b16 %v692, %v691
        %709 = vmatprep.subr.bf16.mxu0 0
        %710 = vmatpush1.bf16.msra.mxu0 %v693
        %711 = vmatprep.subr.bf16.mxu0 0
        %712 = vmatpush1.bf16.msra.mxu0 %v694
        %713 = vmatprep.subr.bf16.mxu0 0
        %714 = vmatpush1.bf16.msra.mxu0 %v695
        %715 = vmatprep.subr.bf16.mxu0 0
        %716 = vmatpush1.bf16.msra.mxu0 %v696
        %717 = vmatprep.subr.bf16.mxu0 0
        %718 = vmatpush1.bf16.msra.mxu0 %v697
        %719 = vmatprep.subr.bf16.mxu0 0
        %720 = vmatpush1.bf16.msra.mxu0 %v698
        %721 = vmatprep.subr.bf16.mxu0 0
        %722 = vmatpush1.bf16.msra.mxu0 %v699
        %723 = vmatprep.subr.bf16.mxu0 0
        %724 = vmatpush1.bf16.msra.mxu0 %v700
        %725 = vmatprep.subr.bf16.mxu0 0
        %726 = vmatpush1.bf16.msra.mxu0 0
        %727 = vmatprep.subr.bf16.mxu0 0
        %728 = vmatpush1.bf16.msra.mxu0 0
        %729 = vmatprep.subr.bf16.mxu0 0
        %730 = vmatpush1.bf16.msra.mxu0 0
        %731 = vmatprep.subr.bf16.mxu0 0
        %732 = vmatpush1.bf16.msra.mxu0 0
        %733 = vmatprep.subr.bf16.mxu0 0
        %734 = vmatpush1.bf16.msra.mxu0 0
        %735 = vmatprep.subr.bf16.mxu0 0
        %736 = vmatpush1.bf16.msra.mxu0 0
        %737 = vmatprep.subr.bf16.mxu0 0
        %738 = vmatpush1.bf16.msra.mxu0 0
        %739 = vmatprep.subr.bf16.mxu0 0
        %740 = vmatpush1.bf16.msra.mxu0 0
        %741 = vmatprep.mubr.bf16.mxu0 0
        %742 = vmatmul.mubr.bf16.gmra.mrb[0].mxu0 %v597
        %v743 = vpop.f32.mrb[0].mxu0
        %v744 = vadd.f32 0.0, %v743
        %v745 = vpop.f32.mrb[0].mxu0
        %v746 = vpop.f32.mrb[0].mxu0
        %v747 = vadd.f32 0.0, %v746
        %v748 = vpop.f32.mrb[0].mxu0
        %749 = vmatprep.mubr.bf16.mxu0 0
        %750 = vmatmul.mubr.bf16.gmra.mrb[0].mxu0 %v598
        %v751 = vpop.f32.mrb[0].mxu0
        %v752 = vadd.f32 0.0, %v751
        %v753 = vpop.f32.mrb[0].mxu0
        %v754 = vpop.f32.mrb[0].mxu0
        %v755 = vadd.f32 0.0, %v754
        %v756 = vpop.f32.mrb[0].mxu0
        %757 = vmatprep.mubr.bf16.mxu0 0
        %758 = vmatmul.mubr.bf16.gmra.mrb[0].mxu0 %v599
        %v759 = vpop.f32.mrb[0].mxu0
        %v760 = vadd.f32 0.0, %v759
        %v761 = vpop.f32.mrb[0].mxu0
        %v762 = vpop.f32.mrb[0].mxu0
        %v763 = vadd.f32 0.0, %v762
        %v764 = vpop.f32.mrb[0].mxu0
        %765 = vmatprep.mubr.bf16.mxu0 0
        %766 = vmatmul.mubr.bf16.gmra.mrb[0].mxu0 %v600
        %v767 = vpop.f32.mrb[0].mxu0
        %v768 = vadd.f32 0.0, %v767
        %v769 = vpop.f32.mrb[0].mxu0
        %v770 = vpop.f32.mrb[0].mxu0
        %v771 = vadd.f32 0.0, %v770
        %v772 = vpop.f32.mrb[0].mxu0
        %773 = vmatprep.mubr.bf16.mxu0 0
        %774 = vmatmul.mubr.bf16.gmra.mrb[0].mxu0 %v601
        %v775 = vpop.f32.mrb[0].mxu0
        %v776 = vadd.f32 0.0, %v775
        %v777 = vpop.f32.mrb[0].mxu0
        %v778 = vpop.f32.mrb[0].mxu0
        %v779 = vadd.f32 0.0, %v778
        %v780 = vpop.f32.mrb[0].mxu0
        %781 = vmatprep.mubr.bf16.mxu0 0
        %782 = vmatmul.mubr.bf16.gmra.mrb[0].mxu0 %v602
        %v783 = vpop.f32.mrb[0].mxu0
        %v784 = vadd.f32 0.0, %v783
        %v785 = vpop.f32.mrb[0].mxu0
        %v786 = vpop.f32.mrb[0].mxu0
        %v787 = vadd.f32 0.0, %v786
        %v788 = vpop.f32.mrb[0].mxu0
        %789 = vmatprep.mubr.bf16.mxu0 0
        %790 = vmatmul.mubr.bf16.gmra.mrb[0].mxu0 %v603
        %v791 = vpop.f32.mrb[0].mxu0
        %v792 = vadd.f32 0.0, %v791
        %v793 = vpop.f32.mrb[0].mxu0
        %v794 = vpop.f32.mrb[0].mxu0
        %v795 = vadd.f32 0.0, %v794
        %v796 = vpop.f32.mrb[0].mxu0
        %797 = vmatprep.mubr.bf16.mxu0 0
        %798 = vmatmul.mubr.bf16.gmra.mrb[0].mxu0 %v604
        %v799 = vpop.f32.mrb[0].mxu0
        %v800 = vadd.f32 0.0, %v799
        %v801 = vpop.f32.mrb[0].mxu0
        %v802 = vpop.f32.mrb[0].mxu0
        %v803 = vadd.f32 0.0, %v802
        %v804 = vpop.f32.mrb[0].mxu0
        %805 = vmatprep.mubr.bf16.mxu0 0
        %806 = vmatmul.mubr.bf16.gmra.mrb[0].mxu0 %v605
        %v807 = vpop.f32.mrb[0].mxu0
        %v808 = vadd.f32 0.0, %v807
        %v809 = vpop.f32.mrb[0].mxu0
        %v810 = vpop.f32.mrb[0].mxu0
        %v811 = vadd.f32 0.0, %v810
        %v812 = vpop.f32.mrb[0].mxu0
        %813 = vmatprep.mubr.bf16.mxu0 0
        %814 = vmatmul.mubr.bf16.gmra.mrb[0].mxu0 %v606
        %v815 = vpop.f32.mrb[0].mxu0
        %v816 = vadd.f32 0.0, %v815
        %v817 = vpop.f32.mrb[0].mxu0
        %v818 = vpop.f32.mrb[0].mxu0
        %v819 = vadd.f32 0.0, %v818
        %v820 = vpop.f32.mrb[0].mxu0
        %821 = vmatprep.mubr.bf16.mxu0 0
        %822 = vmatmul.mubr.bf16.gmra.mrb[0].mxu0 %v607
        %v823 = vpop.f32.mrb[0].mxu0
        %v824 = vadd.f32 0.0, %v823
        %v825 = vpop.f32.mrb[0].mxu0
        %v826 = vpop.f32.mrb[0].mxu0
        %v827 = vadd.f32 0.0, %v826
        %v828 = vpop.f32.mrb[0].mxu0
        %829 = vmatprep.mubr.bf16.mxu0 0
        %830 = vmatmul.mubr.bf16.gmra.mrb[0].mxu0 %v608
        %v831 = vpop.f32.mrb[0].mxu0
        %v832 = vadd.f32 0.0, %v831
        %v833 = vpop.f32.mrb[0].mxu0
        %v834 = vpop.f32.mrb[0].mxu0
        %v835 = vadd.f32 0.0, %v834
        %v836 = vpop.f32.mrb[0].mxu0
        %837 = vmatprep.mubr.bf16.mxu0 0
        %838 = vmatmul.mubr.bf16.gmra.mrb[0].mxu0 %v609
        %v839 = vpop.f32.mrb[0].mxu0
        %v840 = vadd.f32 0.0, %v839
        %v841 = vpop.f32.mrb[0].mxu0
        %v842 = vpop.f32.mrb[0].mxu0
        %v843 = vadd.f32 0.0, %v842
        %v844 = vpop.f32.mrb[0].mxu0
        %845 = vmatprep.mubr.bf16.mxu0 0
        %846 = vmatmul.mubr.bf16.gmra.mrb[0].mxu0 %v610
        %v847 = vpop.f32.mrb[0].mxu0
        %v848 = vadd.f32 0.0, %v847
        %v849 = vpop.f32.mrb[0].mxu0
        %v850 = vpop.f32.mrb[0].mxu0
        %v851 = vadd.f32 0.0, %v850
        %v852 = vpop.f32.mrb[0].mxu0
        %853 = vmatprep.mubr.bf16.mxu0 0
        %854 = vmatmul.mubr.bf16.gmra.mrb[0].mxu0 %v611
        %v855 = vpop.f32.mrb[0].mxu0
        %v856 = vadd.f32 0.0, %v855
        %v857 = vpop.f32.mrb[0].mxu0
        %v858 = vpop.f32.mrb[0].mxu0
        %v859 = vadd.f32 0.0, %v858
        %v860 = vpop.f32.mrb[0].mxu0
        %861 = vmatprep.mubr.bf16.mxu0 0
        %862 = vmatmul.mubr.bf16.gmra.mrb[0].mxu0 %v612
        %v863 = vpop.f32.mrb[0].mxu0
        %v864 = vadd.f32 0.0, %v863
        %v865 = vpop.f32.mrb[0].mxu0
        %v866 = vpop.f32.mrb[0].mxu0
        %v867 = vadd.f32 0.0, %v866
        %v868 = vpop.f32.mrb[0].mxu0
        %869 = vmatprep.mubr.bf16.mxu0 0
        %870 = vmatmul.mubr.bf16.gmra.mrb[0].mxu0 %v613
        %v871 = vpop.f32.mrb[0].mxu0
        %v872 = vadd.f32 0.0, %v871
        %v873 = vpop.f32.mrb[0].mxu0
        %v874 = vpop.f32.mrb[0].mxu0
        %v875 = vadd.f32 0.0, %v874
        %v876 = vpop.f32.mrb[0].mxu0
        %877 = vmatprep.mubr.bf16.mxu0 0
        %878 = vmatmul.mubr.bf16.gmra.mrb[0].mxu0 %v614
        %v879 = vpop.f32.mrb[0].mxu0
        %v880 = vadd.f32 0.0, %v879
        %v881 = vpop.f32.mrb[0].mxu0
        %v882 = vpop.f32.mrb[0].mxu0
        %v883 = vadd.f32 0.0, %v882
        %v884 = vpop.f32.mrb[0].mxu0
        %885 = vmatprep.mubr.bf16.mxu0 0
        %886 = vmatmul.mubr.bf16.gmra.mrb[0].mxu0 %v615
        %v887 = vpop.f32.mrb[0].mxu0
        %v888 = vadd.f32 0.0, %v887
        %v889 = vpop.f32.mrb[0].mxu0
        %v890 = vpop.f32.mrb[0].mxu0
        %v891 = vadd.f32 0.0, %v890
        %v892 = vpop.f32.mrb[0].mxu0
        %893 = vmatprep.mubr.bf16.mxu0 0
        %894 = vmatmul.mubr.bf16.gmra.mrb[0].mxu0 %v616
        %v895 = vpop.f32.mrb[0].mxu0
        %v896 = vadd.f32 0.0, %v895
        %v897 = vpop.f32.mrb[0].mxu0
        %v898 = vpop.f32.mrb[0].mxu0
        %v899 = vadd.f32 0.0, %v898
        %v900 = vpop.f32.mrb[0].mxu0
        %901 = vmatprep.mubr.bf16.mxu0 0
        %902 = vmatmul.mubr.bf16.gmra.mrb[0].mxu0 %v617
        %v903 = vpop.f32.mrb[0].mxu0
        %v904 = vadd.f32 0.0, %v903
        %v905 = vpop.f32.mrb[0].mxu0
        %v906 = vpop.f32.mrb[0].mxu0
        %v907 = vadd.f32 0.0, %v906
        %v908 = vpop.f32.mrb[0].mxu0
        %909 = vmatprep.mubr.bf16.mxu0 0
        %910 = vmatmul.mubr.bf16.gmra.mrb[0].mxu0 %v618
        %v911 = vpop.f32.mrb[0].mxu0
        %v912 = vadd.f32 0.0, %v911
        %v913 = vpop.f32.mrb[0].mxu0
        %v914 = vpop.f32.mrb[0].mxu0
        %v915 = vadd.f32 0.0, %v914
        %v916 = vpop.f32.mrb[0].mxu0
        %917 = vmatprep.mubr.bf16.mxu0 0
        %918 = vmatmul.mubr.bf16.gmra.mrb[0].mxu0 %v619
        %v919 = vpop.f32.mrb[0].mxu0
        %v920 = vadd.f32 0.0, %v919
        %v921 = vpop.f32.mrb[0].mxu0
        %v922 = vpop.f32.mrb[0].mxu0
        %v923 = vadd.f32 0.0, %v922
        %v924 = vpop.f32.mrb[0].mxu0
        %925 = vmatprep.mubr.bf16.mxu0 0
        %926 = vmatmul.mubr.bf16.gmra.mrb[0].mxu0 %v620
        %v927 = vpop.f32.mrb[0].mxu0
        %v928 = vadd.f32 0.0, %v927
        %v929 = vpop.f32.mrb[0].mxu0
        %v930 = vpop.f32.mrb[0].mxu0
        %v931 = vadd.f32 0.0, %v930
        %v932 = vpop.f32.mrb[0].mxu0
        %933 = vmatprep.mubr.bf16.mxu0 0
        %934 = vmatmul.mubr.bf16.gmra.mrb[0].mxu0 %v621
        %v935 = vpop.f32.mrb[0].mxu0
        %v936 = vadd.f32 0.0, %v935
        %v937 = vpop.f32.mrb[0].mxu0
        %v938 = vpop.f32.mrb[0].mxu0
        %v939 = vadd.f32 0.0, %v938
        %v940 = vpop.f32.mrb[0].mxu0
        %941 = vmatprep.mubr.bf16.mxu0 0
        %942 = vmatmul.mubr.bf16.gmra.mrb[0].mxu0 %v622
        %v943 = vpop.f32.mrb[0].mxu0
        %v944 = vadd.f32 0.0, %v943
        %v945 = vpop.f32.mrb[0].mxu0
        %v946 = vpop.f32.mrb[0].mxu0
        %v947 = vadd.f32 0.0, %v946
        %v948 = vpop.f32.mrb[0].mxu0
        %949 = vmatprep.mubr.bf16.mxu0 0
        %950 = vmatmul.mubr.bf16.gmra.mrb[0].mxu0 %v623
        %v951 = vpop.f32.mrb[0].mxu0
        %v952 = vadd.f32 0.0, %v951
        %v953 = vpop.f32.mrb[0].mxu0
        %v954 = vpop.f32.mrb[0].mxu0
        %v955 = vadd.f32 0.0, %v954
        %v956 = vpop.f32.mrb[0].mxu0
        %957 = vmatprep.mubr.bf16.mxu0 0
        %958 = vmatmul.mubr.bf16.gmra.mrb[0].mxu0 %v624
        %v959 = vpop.f32.mrb[0].mxu0
        %v960 = vadd.f32 0.0, %v959
        %v961 = vpop.f32.mrb[0].mxu0
        %v962 = vpop.f32.mrb[0].mxu0
        %v963 = vadd.f32 0.0, %v962
        %v964 = vpop.f32.mrb[0].mxu0
        %965 = vmatprep.mubr.bf16.mxu0 0
        %966 = vmatmul.mubr.bf16.gmra.mrb[0].mxu0 %v625
        %v967 = vpop.f32.mrb[0].mxu0
        %v968 = vadd.f32 0.0, %v967
        %v969 = vpop.f32.mrb[0].mxu0
        %v970 = vpop.f32.mrb[0].mxu0
        %v971 = vadd.f32 0.0, %v970
        %v972 = vpop.f32.mrb[0].mxu0
        %973 = vmatprep.mubr.bf16.mxu0 0
        %974 = vmatmul.mubr.bf16.gmra.mrb[0].mxu0 %v626
        %v975 = vpop.f32.mrb[0].mxu0
        %v976 = vadd.f32 0.0, %v975
        %v977 = vpop.f32.mrb[0].mxu0
        %v978 = vpop.f32.mrb[0].mxu0
        %v979 = vadd.f32 0.0, %v978
        %v980 = vpop.f32.mrb[0].mxu0
        %981 = vmatprep.mubr.bf16.mxu0 0
        %982 = vmatmul.mubr.bf16.gmra.mrb[0].mxu0 %v627
        %v983 = vpop.f32.mrb[0].mxu0
        %v984 = vadd.f32 0.0, %v983
        %v985 = vpop.f32.mrb[0].mxu0
        %v986 = vpop.f32.mrb[0].mxu0
        %v987 = vadd.f32 0.0, %v986
        %v988 = vpop.f32.mrb[0].mxu0
        %989 = vmatprep.mubr.bf16.mxu0 0
        %990 = vmatmul.mubr.bf16.gmra.mrb[0].mxu0 %v628
        %v991 = vpop.f32.mrb[0].mxu0
        %v992 = vadd.f32 0.0, %v991
        %v993 = vpop.f32.mrb[0].mxu0
        %v994 = vpop.f32.mrb[0].mxu0
        %v995 = vadd.f32 0.0, %v994
        %v996 = vpop.f32.mrb[0].mxu0
        %997 = vdwg.mxu0
        %v998 = vadd.f32 %v325, %v744
        %v999 = vadd.f32 %v326, %v747
        %v1000 = vadd.f32 %v327, %v752
        %v1001 = vadd.f32 %v328, %v755
        %v1002 = vadd.f32 %v329, %v760
        %v1003 = vadd.f32 %v330, %v763
        %v1004 = vadd.f32 %v331, %v768
        %v1005 = vadd.f32 %v332, %v771
        %v1006 = vadd.f32 %v333, %v776
        %v1007 = vadd.f32 %v334, %v779
        %v1008 = vadd.f32 %v335, %v784
        %v1009 = vadd.f32 %v336, %v787
        %v1010 = vadd.f32 %v337, %v792
        %v1011 = vadd.f32 %v338, %v795
        %v1012 = vadd.f32 %v339, %v800
        %v1013 = vadd.f32 %v340, %v803
        %v1014 = vadd.f32 %v341, %v808
        %v1015 = vadd.f32 %v342, %v811
        %v1016 = vadd.f32 %v343, %v816
        %v1017 = vadd.f32 %v344, %v819
        %v1018 = vadd.f32 %v345, %v824
        %v1019 = vadd.f32 %v346, %v827
        %v1020 = vadd.f32 %v347, %v832
        %v1021 = vadd.f32 %v348, %v835
        %v1022 = vadd.f32 %v349, %v840
        %v1023 = vadd.f32 %v350, %v843
        %v1024 = vadd.f32 %v351, %v848
        %v1025 = vadd.f32 %v352, %v851
        %v1026 = vadd.f32 %v353, %v856
        %v1027 = vadd.f32 %v354, %v859
        %v1028 = vadd.f32 %v355, %v864
        %v1029 = vadd.f32 %v356, %v867
        %v1030 = vadd.f32 %v357, %v872
        %v1031 = vadd.f32 %v358, %v875
        %v1032 = vadd.f32 %v359, %v880
        %v1033 = vadd.f32 %v360, %v883
        %v1034 = vadd.f32 %v361, %v888
        %v1035 = vadd.f32 %v362, %v891
        %v1036 = vadd.f32 %v363, %v896
        %v1037 = vadd.f32 %v364, %v899
        %v1038 = vadd.f32 %v365, %v904
        %v1039 = vadd.f32 %v366, %v907
        %v1040 = vadd.f32 %v367, %v912
        %v1041 = vadd.f32 %v368, %v915
        %v1042 = vadd.f32 %v369, %v920
        %v1043 = vadd.f32 %v370, %v923
        %v1044 = vadd.f32 %v371, %v928
        %v1045 = vadd.f32 %v372, %v931
        %v1046 = vadd.f32 %v373, %v936
        %v1047 = vadd.f32 %v374, %v939
        %v1048 = vadd.f32 %v375, %v944
        %v1049 = vadd.f32 %v376, %v947
        %v1050 = vadd.f32 %v377, %v952
        %v1051 = vadd.f32 %v378, %v955
        %v1052 = vadd.f32 %v379, %v960
        %v1053 = vadd.f32 %v380, %v963
        %v1054 = vadd.f32 %v381, %v968
        %v1055 = vadd.f32 %v382, %v971
        %v1056 = vadd.f32 %v383, %v976
        %v1057 = vadd.f32 %v384, %v979
        %v1058 = vadd.f32 %v385, %v984
        %v1059 = vadd.f32 %v386, %v987
        %v1060 = vadd.f32 %v387, %v992
        %v1061 = vadd.f32 %v388, %v995
        %1062 = vst [vmem:[#allocation2] sm:$0xff] %v998
        %1063 = vst [vmem:[#allocation2 + $0x8] sm:$0xff] %v999
        %1064 = vst [vmem:[#allocation2 + $0x10] sm:$0xff] %v1000
        %1065 = vst [vmem:[#allocation2 + $0x18] sm:$0xff] %v1001
        %1066 = vst [vmem:[#allocation2 + $0x20] sm:$0xff] %v1002
        %1067 = vst [vmem:[#allocation2 + $0x28] sm:$0xff] %v1003
        %1068 = vst [vmem:[#allocation2 + $0x30] sm:$0xff] %v1004
        %1069 = vst [vmem:[#allocation2 + $0x38] sm:$0xff] %v1005
        %1070 = vst [vmem:[#allocation2 + $0x40] sm:$0xff] %v1006
        %1071 = vst [vmem:[#allocation2 + $0x48] sm:$0xff] %v1007
        %1072 = vst [vmem:[#allocation2 + $0x50] sm:$0xff] %v1008
        %1073 = vst [vmem:[#allocation2 + $0x58] sm:$0xff] %v1009
        %1074 = vst [vmem:[#allocation2 + $0x60] sm:$0xff] %v1010
        %1075 = vst [vmem:[#allocation2 + $0x68] sm:$0xff] %v1011
        %1076 = vst [vmem:[#allocation2 + $0x70] sm:$0xff] %v1012
        %1077 = vst [vmem:[#allocation2 + $0x78] sm:$0xff] %v1013
        %1078 = vst [vmem:[#allocation2 + $0x80] sm:$0xff] %v1014
        %1079 = vst [vmem:[#allocation2 + $0x88] sm:$0xff] %v1015
        %1080 = vst [vmem:[#allocation2 + $0x90] sm:$0xff] %v1016
        %1081 = vst [vmem:[#allocation2 + $0x98] sm:$0xff] %v1017
        %1082 = vst [vmem:[#allocation2 + $0xa0] sm:$0xff] %v1018
        %1083 = vst [vmem:[#allocation2 + $0xa8] sm:$0xff] %v1019
        %1084 = vst [vmem:[#allocation2 + $0xb0] sm:$0xff] %v1020
        %1085 = vst [vmem:[#allocation2 + $0xb8] sm:$0xff] %v1021
        %1086 = vst [vmem:[#allocation2 + $0xc0] sm:$0xff] %v1022
        %1087 = vst [vmem:[#allocation2 + $0xc8] sm:$0xff] %v1023
        %1088 = vst [vmem:[#allocation2 + $0xd0] sm:$0xff] %v1024
        %1089 = vst [vmem:[#allocation2 + $0xd8] sm:$0xff] %v1025
        %1090 = vst [vmem:[#allocation2 + $0xe0] sm:$0xff] %v1026
        %1091 = vst [vmem:[#allocation2 + $0xe8] sm:$0xff] %v1027
        %1092 = vst [vmem:[#allocation2 + $0xf0] sm:$0xff] %v1028
        %1093 = vst [vmem:[#allocation2 + $0xf8] sm:$0xff] %v1029
        %1094 = vst [vmem:[#allocation2 + $0x100] sm:$0xff] %v1030
        %1095 = vst [vmem:[#allocation2 + $0x108] sm:$0xff] %v1031
        %1096 = vst [vmem:[#allocation2 + $0x110] sm:$0xff] %v1032
        %1097 = vst [vmem:[#allocation2 + $0x118] sm:$0xff] %v1033
        %1098 = vst [vmem:[#allocation2 + $0x120] sm:$0xff] %v1034
        %1099 = vst [vmem:[#allocation2 + $0x128] sm:$0xff] %v1035
        %1100 = vst [vmem:[#allocation2 + $0x130] sm:$0xff] %v1036
        %1101 = vst [vmem:[#allocation2 + $0x138] sm:$0xff] %v1037
        %1102 = vst [vmem:[#allocation2 + $0x140] sm:$0xff] %v1038
        %1103 = vst [vmem:[#allocation2 + $0x148] sm:$0xff] %v1039
        %1104 = vst [vmem:[#allocation2 + $0x150] sm:$0xff] %v1040
        %1105 = vst [vmem:[#allocation2 + $0x158] sm:$0xff] %v1041
        %1106 = vst [vmem:[#allocation2 + $0x160] sm:$0xff] %v1042
        %1107 = vst [vmem:[#allocation2 + $0x168] sm:$0xff] %v1043
        %1108 = vst [vmem:[#allocation2 + $0x170] sm:$0xff] %v1044
        %1109 = vst [vmem:[#allocation2 + $0x178] sm:$0xff] %v1045
        %1110 = vst [vmem:[#allocation2 + $0x180] sm:$0xff] %v1046
        %1111 = vst [vmem:[#allocation2 + $0x188] sm:$0xff] %v1047
        %1112 = vst [vmem:[#allocation2 + $0x190] sm:$0xff] %v1048
        %1113 = vst [vmem:[#allocation2 + $0x198] sm:$0xff] %v1049
        %1114 = vst [vmem:[#allocation2 + $0x1a0] sm:$0xff] %v1050
        %1115 = vst [vmem:[#allocation2 + $0x1a8] sm:$0xff] %v1051
        %1116 = vst [vmem:[#allocation2 + $0x1b0] sm:$0xff] %v1052
        %1117 = vst [vmem:[#allocation2 + $0x1b8] sm:$0xff] %v1053
        %1118 = vst [vmem:[#allocation2 + $0x1c0] sm:$0xff] %v1054
        %1119 = vst [vmem:[#allocation2 + $0x1c8] sm:$0xff] %v1055
        %1120 = vst [vmem:[#allocation2 + $0x1d0] sm:$0xff] %v1056
        %1121 = vst [vmem:[#allocation2 + $0x1d8] sm:$0xff] %v1057
        %1122 = vst [vmem:[#allocation2 + $0x1e0] sm:$0xff] %v1058
        %1123 = vst [vmem:[#allocation2 + $0x1e8] sm:$0xff] %v1059
        %1124 = vst [vmem:[#allocation2 + $0x1f0] sm:$0xff] %v1060
        %1125 = vst [vmem:[#allocation2 + $0x1f8] sm:$0xff] %v1061
        // Predicated region
        $region41: #{tpu_custom_call.1} parent=27 // pred_check
          %p1126 = pneg %p256
        $region42: #{tpu_custom_call.1} parent=27 // pred_check_branch
          %1128 = sbr.rel (%p1126) target = $region44
        $region43: #{tpu_custom_call.1} parent=27 // pred_region
          %v1129 = vld [vmem:[#allocation2] sm:$0xff]
          %v1130 = vld [vmem:[#allocation2 + $0x8] sm:$0xff]
          %v1131 = vld [vmem:[#allocation2 + $0x10] sm:$0xff]
          %v1132 = vld [vmem:[#allocation2 + $0x18] sm:$0xff]
          %v1133 = vld [vmem:[#allocation2 + $0x20] sm:$0xff]
          %v1134 = vld [vmem:[#allocation2 + $0x28] sm:$0xff]
          %v1135 = vld [vmem:[#allocation2 + $0x30] sm:$0xff]
          %v1136 = vld [vmem:[#allocation2 + $0x38] sm:$0xff]
          %v1137 = vld [vmem:[#allocation2 + $0x40] sm:$0xff]
          %v1138 = vld [vmem:[#allocation2 + $0x48] sm:$0xff]
          %v1139 = vld [vmem:[#allocation2 + $0x50] sm:$0xff]
          %v1140 = vld [vmem:[#allocation2 + $0x58] sm:$0xff]
          %v1141 = vld [vmem:[#allocation2 + $0x60] sm:$0xff]
          %v1142 = vld [vmem:[#allocation2 + $0x68] sm:$0xff]
          %v1143 = vld [vmem:[#allocation2 + $0x70] sm:$0xff]
          %v1144 = vld [vmem:[#allocation2 + $0x78] sm:$0xff]
          %v1145 = vld [vmem:[#allocation2 + $0x80] sm:$0xff]
          %v1146 = vld [vmem:[#allocation2 + $0x88] sm:$0xff]
          %v1147 = vld [vmem:[#allocation2 + $0x90] sm:$0xff]
          %v1148 = vld [vmem:[#allocation2 + $0x98] sm:$0xff]
          %v1149 = vld [vmem:[#allocation2 + $0xa0] sm:$0xff]
          %v1150 = vld [vmem:[#allocation2 + $0xa8] sm:$0xff]
          %v1151 = vld [vmem:[#allocation2 + $0xb0] sm:$0xff]
          %v1152 = vld [vmem:[#allocation2 + $0xb8] sm:$0xff]
          %v1153 = vld [vmem:[#allocation2 + $0xc0] sm:$0xff]
          %v1154 = vld [vmem:[#allocation2 + $0xc8] sm:$0xff]
          %v1155 = vld [vmem:[#allocation2 + $0xd0] sm:$0xff]
          %v1156 = vld [vmem:[#allocation2 + $0xd8] sm:$0xff]
          %v1157 = vld [vmem:[#allocation2 + $0xe0] sm:$0xff]
          %v1158 = vld [vmem:[#allocation2 + $0xe8] sm:$0xff]
          %v1159 = vld [vmem:[#allocation2 + $0xf0] sm:$0xff]
          %v1160 = vld [vmem:[#allocation2 + $0xf8] sm:$0xff]
          %v1161 = vld [vmem:[#allocation2 + $0x100] sm:$0xff]
          %v1162 = vld [vmem:[#allocation2 + $0x108] sm:$0xff]
          %v1163 = vld [vmem:[#allocation2 + $0x110] sm:$0xff]
          %v1164 = vld [vmem:[#allocation2 + $0x118] sm:$0xff]
          %v1165 = vld [vmem:[#allocation2 + $0x120] sm:$0xff]
          %v1166 = vld [vmem:[#allocation2 + $0x128] sm:$0xff]
          %v1167 = vld [vmem:[#allocation2 + $0x130] sm:$0xff]
          %v1168 = vld [vmem:[#allocation2 + $0x138] sm:$0xff]
          %v1169 = vld [vmem:[#allocation2 + $0x140] sm:$0xff]
          %v1170 = vld [vmem:[#allocation2 + $0x148] sm:$0xff]
          %v1171 = vld [vmem:[#allocation2 + $0x150] sm:$0xff]
          %v1172 = vld [vmem:[#allocation2 + $0x158] sm:$0xff]
          %v1173 = vld [vmem:[#allocation2 + $0x160] sm:$0xff]
          %v1174 = vld [vmem:[#allocation2 + $0x168] sm:$0xff]
          %v1175 = vld [vmem:[#allocation2 + $0x170] sm:$0xff]
          %v1176 = vld [vmem:[#allocation2 + $0x178] sm:$0xff]
          %v1177 = vld [vmem:[#allocation2 + $0x180] sm:$0xff]
          %v1178 = vld [vmem:[#allocation2 + $0x188] sm:$0xff]
          %v1179 = vld [vmem:[#allocation2 + $0x190] sm:$0xff]
          %v1180 = vld [vmem:[#allocation2 + $0x198] sm:$0xff]
          %v1181 = vld [vmem:[#allocation2 + $0x1a0] sm:$0xff]
          %v1182 = vld [vmem:[#allocation2 + $0x1a8] sm:$0xff]
          %v1183 = vld [vmem:[#allocation2 + $0x1b0] sm:$0xff]
          %v1184 = vld [vmem:[#allocation2 + $0x1b8] sm:$0xff]
          %v1185 = vld [vmem:[#allocation2 + $0x1c0] sm:$0xff]
          %v1186 = vld [vmem:[#allocation2 + $0x1c8] sm:$0xff]
          %v1187 = vld [vmem:[#allocation2 + $0x1d0] sm:$0xff]
          %v1188 = vld [vmem:[#allocation2 + $0x1d8] sm:$0xff]
          %v1189 = vld [vmem:[#allocation2 + $0x1e0] sm:$0xff]
          %v1190 = vld [vmem:[#allocation2 + $0x1e8] sm:$0xff]
          %v1191 = vld [vmem:[#allocation2 + $0x1f0] sm:$0xff]
          %v1192 = vld [vmem:[#allocation2 + $0x1f8] sm:$0xff]
          %v1193 = vpack.c.bf16 %v1130, %v1129
          %v1194 = vpack.c.bf16 %v1132, %v1131
          %v1195 = vpack.c.bf16 %v1134, %v1133
          %v1196 = vpack.c.bf16 %v1136, %v1135
          %v1197 = vpack.c.bf16 %v1138, %v1137
          %v1198 = vpack.c.bf16 %v1140, %v1139
          %v1199 = vpack.c.bf16 %v1142, %v1141
          %v1200 = vpack.c.bf16 %v1144, %v1143
          %v1201 = vpack.c.bf16 %v1146, %v1145
          %v1202 = vpack.c.bf16 %v1148, %v1147
          %v1203 = vpack.c.bf16 %v1150, %v1149
          %v1204 = vpack.c.bf16 %v1152, %v1151
          %v1205 = vpack.c.bf16 %v1154, %v1153
          %v1206 = vpack.c.bf16 %v1156, %v1155
          %v1207 = vpack.c.bf16 %v1158, %v1157
          %v1208 = vpack.c.bf16 %v1160, %v1159
          %v1209 = vpack.c.bf16 %v1162, %v1161
          %v1210 = vpack.c.bf16 %v1164, %v1163
          %v1211 = vpack.c.bf16 %v1166, %v1165
          %v1212 = vpack.c.bf16 %v1168, %v1167
          %v1213 = vpack.c.bf16 %v1170, %v1169
          %v1214 = vpack.c.bf16 %v1172, %v1171
          %v1215 = vpack.c.bf16 %v1174, %v1173
          %v1216 = vpack.c.bf16 %v1176, %v1175
          %v1217 = vpack.c.bf16 %v1178, %v1177
          %v1218 = vpack.c.bf16 %v1180, %v1179
          %v1219 = vpack.c.bf16 %v1182, %v1181
          %v1220 = vpack.c.bf16 %v1184, %v1183
          %v1221 = vpack.c.bf16 %v1186, %v1185
          %v1222 = vpack.c.bf16 %v1188, %v1187
          %v1223 = vpack.c.bf16 %v1190, %v1189
          %v1224 = vpack.c.bf16 %v1192, %v1191
          %v1257 = vunpack.c.l.b16 %v1193
          %v1258 = vunpack.c.h.b16 %v1193
          %v1259 = vunpack.c.l.b16 %v1194
          %v1260 = vunpack.c.h.b16 %v1194
          %v1261 = vunpack.c.l.b16 %v1195
          %v1262 = vunpack.c.h.b16 %v1195
          %v1263 = vunpack.c.l.b16 %v1196
          %v1264 = vunpack.c.h.b16 %v1196
          %v1265 = vunpack.c.l.b16 %v1197
          %v1266 = vunpack.c.h.b16 %v1197
          %v1267 = vunpack.c.l.b16 %v1198
          %v1268 = vunpack.c.h.b16 %v1198
          %v1269 = vunpack.c.l.b16 %v1199
          %v1270 = vunpack.c.h.b16 %v1199
          %v1271 = vunpack.c.l.b16 %v1200
          %v1272 = vunpack.c.h.b16 %v1200
          %v1273 = vunpack.c.l.b16 %v1201
          %v1274 = vunpack.c.h.b16 %v1201
          %v1275 = vunpack.c.l.b16 %v1202
          %v1276 = vunpack.c.h.b16 %v1202
          %v1277 = vunpack.c.l.b16 %v1203
          %v1278 = vunpack.c.h.b16 %v1203
          %v1279 = vunpack.c.l.b16 %v1204
          %v1280 = vunpack.c.h.b16 %v1204
          %v1281 = vunpack.c.l.b16 %v1205
          %v1282 = vunpack.c.h.b16 %v1205
          %v1283 = vunpack.c.l.b16 %v1206
          %v1284 = vunpack.c.h.b16 %v1206
          %v1285 = vunpack.c.l.b16 %v1207
          %v1286 = vunpack.c.h.b16 %v1207
          %v1287 = vunpack.c.l.b16 %v1208
          %v1288 = vunpack.c.h.b16 %v1208
          %v1289 = vunpack.c.l.b16 %v1209
          %v1290 = vunpack.c.h.b16 %v1209
          %v1291 = vunpack.c.l.b16 %v1210
          %v1292 = vunpack.c.h.b16 %v1210
          %v1293 = vunpack.c.l.b16 %v1211
          %v1294 = vunpack.c.h.b16 %v1211
          %v1295 = vunpack.c.l.b16 %v1212
          %v1296 = vunpack.c.h.b16 %v1212
          %v1297 = vunpack.c.l.b16 %v1213
          %v1298 = vunpack.c.h.b16 %v1213
          %v1299 = vunpack.c.l.b16 %v1214
          %v1300 = vunpack.c.h.b16 %v1214
          %v1301 = vunpack.c.l.b16 %v1215
          %v1302 = vunpack.c.h.b16 %v1215
          %v1303 = vunpack.c.l.b16 %v1216
          %v1304 = vunpack.c.h.b16 %v1216
          %v1305 = vunpack.c.l.b16 %v1217
          %v1306 = vunpack.c.h.b16 %v1217
          %v1307 = vunpack.c.l.b16 %v1218
          %v1308 = vunpack.c.h.b16 %v1218
          %v1309 = vunpack.c.l.b16 %v1219
          %v1310 = vunpack.c.h.b16 %v1219
          %v1311 = vunpack.c.l.b16 %v1220
          %v1312 = vunpack.c.h.b16 %v1220
          %v1313 = vunpack.c.l.b16 %v1221
          %v1314 = vunpack.c.h.b16 %v1221
          %v1315 = vunpack.c.l.b16 %v1222
          %v1316 = vunpack.c.h.b16 %v1222
          %v1317 = vunpack.c.l.b16 %v1223
          %v1318 = vunpack.c.h.b16 %v1223
          %v1319 = vunpack.c.l.b16 %v1224
          %v1320 = vunpack.c.h.b16 %v1224
          %v1321 = vpack.c.b16 %v1257, %v1257
          %v1322 = vpack.c.b16 %v1258, %v1258
          %v1323 = vpack.c.b16 %v1259, %v1259
          %v1324 = vpack.c.b16 %v1260, %v1260
          %v1325 = vpack.c.b16 %v1261, %v1261
          %v1326 = vpack.c.b16 %v1262, %v1262
          %v1327 = vpack.c.b16 %v1263, %v1263
          %v1328 = vpack.c.b16 %v1264, %v1264
          %v1329 = vpack.c.b16 %v1265, %v1265
          %v1330 = vpack.c.b16 %v1266, %v1266
          %v1331 = vpack.c.b16 %v1267, %v1267
          %v1332 = vpack.c.b16 %v1268, %v1268
          %v1333 = vpack.c.b16 %v1269, %v1269
          %v1334 = vpack.c.b16 %v1270, %v1270
          %v1335 = vpack.c.b16 %v1271, %v1271
          %v1336 = vpack.c.b16 %v1272, %v1272
          %v1337 = vpack.c.b16 %v1273, %v1273
          %v1338 = vpack.c.b16 %v1274, %v1274
          %v1339 = vpack.c.b16 %v1275, %v1275
          %v1340 = vpack.c.b16 %v1276, %v1276
          %v1341 = vpack.c.b16 %v1277, %v1277
          %v1342 = vpack.c.b16 %v1278, %v1278
          %v1343 = vpack.c.b16 %v1279, %v1279
          %v1344 = vpack.c.b16 %v1280, %v1280
          %v1345 = vpack.c.b16 %v1281, %v1281
          %v1346 = vpack.c.b16 %v1282, %v1282
          %v1347 = vpack.c.b16 %v1283, %v1283
          %v1348 = vpack.c.b16 %v1284, %v1284
          %v1349 = vpack.c.b16 %v1285, %v1285
          %v1350 = vpack.c.b16 %v1286, %v1286
          %v1351 = vpack.c.b16 %v1287, %v1287
          %v1352 = vpack.c.b16 %v1288, %v1288
          %v1353 = vpack.c.b16 %v1289, %v1289
          %v1354 = vpack.c.b16 %v1290, %v1290
          %v1355 = vpack.c.b16 %v1291, %v1291
          %v1356 = vpack.c.b16 %v1292, %v1292
          %v1357 = vpack.c.b16 %v1293, %v1293
          %v1358 = vpack.c.b16 %v1294, %v1294
          %v1359 = vpack.c.b16 %v1295, %v1295
          %v1360 = vpack.c.b16 %v1296, %v1296
          %v1361 = vpack.c.b16 %v1297, %v1297
          %v1362 = vpack.c.b16 %v1298, %v1298
          %v1363 = vpack.c.b16 %v1299, %v1299
          %v1364 = vpack.c.b16 %v1300, %v1300
          %v1365 = vpack.c.b16 %v1301, %v1301
          %v1366 = vpack.c.b16 %v1302, %v1302
          %v1367 = vpack.c.b16 %v1303, %v1303
          %v1368 = vpack.c.b16 %v1304, %v1304
          %v1369 = vpack.c.b16 %v1305, %v1305
          %v1370 = vpack.c.b16 %v1306, %v1306
          %v1371 = vpack.c.b16 %v1307, %v1307
          %v1372 = vpack.c.b16 %v1308, %v1308
          %v1373 = vpack.c.b16 %v1309, %v1309
          %v1374 = vpack.c.b16 %v1310, %v1310
          %v1375 = vpack.c.b16 %v1311, %v1311
          %v1376 = vpack.c.b16 %v1312, %v1312
          %v1377 = vpack.c.b16 %v1313, %v1313
          %v1378 = vpack.c.b16 %v1314, %v1314
          %v1379 = vpack.c.b16 %v1315, %v1315
          %v1380 = vpack.c.b16 %v1316, %v1316
          %v1381 = vpack.c.b16 %v1317, %v1317
          %v1382 = vpack.c.b16 %v1318, %v1318
          %v1383 = vpack.c.b16 %v1319, %v1319
          %v1384 = vpack.c.b16 %v1320, %v1320
          %1449 = vst [vmem:[%s244] sm:$0xf] %v1321
          %1450 = vst [vmem:[%s244 + $0x4] sm:$0xf] %v1322
          %1451 = vst [vmem:[%s244 + $0x8] sm:$0xf] %v1323
          %1452 = vst [vmem:[%s244 + $0xc] sm:$0xf] %v1324
          %1453 = vst [vmem:[%s244 + $0x10] sm:$0xf] %v1325
          %1454 = vst [vmem:[%s244 + $0x14] sm:$0xf] %v1326
          %1455 = vst [vmem:[%s244 + $0x18] sm:$0xf] %v1327
          %1456 = vst [vmem:[%s244 + $0x1c] sm:$0xf] %v1328
          %1457 = vst [vmem:[%s244 + $0x20] sm:$0xf] %v1329
          %1458 = vst [vmem:[%s244 + $0x24] sm:$0xf] %v1330
          %1459 = vst [vmem:[%s244 + $0x28] sm:$0xf] %v1331
          %1460 = vst [vmem:[%s244 + $0x2c] sm:$0xf] %v1332
          %1461 = vst [vmem:[%s244 + $0x30] sm:$0xf] %v1333
          %1462 = vst [vmem:[%s244 + $0x34] sm:$0xf] %v1334
          %1463 = vst [vmem:[%s244 + $0x38] sm:$0xf] %v1335
          %1464 = vst [vmem:[%s244 + $0x3c] sm:$0xf] %v1336
          %1465 = vst [vmem:[%s244 + $0x40] sm:$0xf] %v1337
          %1466 = vst [vmem:[%s244 + $0x44] sm:$0xf] %v1338
          %1467 = vst [vmem:[%s244 + $0x48] sm:$0xf] %v1339
          %1468 = vst [vmem:[%s244 + $0x4c] sm:$0xf] %v1340
          %1469 = vst [vmem:[%s244 + $0x50] sm:$0xf] %v1341
          %1470 = vst [vmem:[%s244 + $0x54] sm:$0xf] %v1342
          %1471 = vst [vmem:[%s244 + $0x58] sm:$0xf] %v1343
          %1472 = vst [vmem:[%s244 + $0x5c] sm:$0xf] %v1344
          %1473 = vst [vmem:[%s244 + $0x60] sm:$0xf] %v1345
          %1474 = vst [vmem:[%s244 + $0x64] sm:$0xf] %v1346
          %1475 = vst [vmem:[%s244 + $0x68] sm:$0xf] %v1347
          %1476 = vst [vmem:[%s244 + $0x6c] sm:$0xf] %v1348
          %1477 = vst [vmem:[%s244 + $0x70] sm:$0xf] %v1349
          %1478 = vst [vmem:[%s244 + $0x74] sm:$0xf] %v1350
          %1479 = vst [vmem:[%s244 + $0x78] sm:$0xf] %v1351
          %1480 = vst [vmem:[%s244 + $0x7c] sm:$0xf] %v1352
          %1481 = vst [vmem:[%s244 + $0x80] sm:$0xf] %v1353
          %1482 = vst [vmem:[%s244 + $0x84] sm:$0xf] %v1354
          %1483 = vst [vmem:[%s244 + $0x88] sm:$0xf] %v1355
          %1484 = vst [vmem:[%s244 + $0x8c] sm:$0xf] %v1356
          %1485 = vst [vmem:[%s244 + $0x90] sm:$0xf] %v1357
          %1486 = vst [vmem:[%s244 + $0x94] sm:$0xf] %v1358
          %1487 = vst [vmem:[%s244 + $0x98] sm:$0xf] %v1359
          %1488 = vst [vmem:[%s244 + $0x9c] sm:$0xf] %v1360
          %1489 = vst [vmem:[%s244 + $0xa0] sm:$0xf] %v1361
          %1490 = vst [vmem:[%s244 + $0xa4] sm:$0xf] %v1362
          %1491 = vst [vmem:[%s244 + $0xa8] sm:$0xf] %v1363
          %1492 = vst [vmem:[%s244 + $0xac] sm:$0xf] %v1364
          %1493 = vst [vmem:[%s244 + $0xb0] sm:$0xf] %v1365
          %1494 = vst [vmem:[%s244 + $0xb4] sm:$0xf] %v1366
          %1495 = vst [vmem:[%s244 + $0xb8] sm:$0xf] %v1367
          %1496 = vst [vmem:[%s244 + $0xbc] sm:$0xf] %v1368
          %1497 = vst [vmem:[%s244 + $0xc0] sm:$0xf] %v1369
          %1498 = vst [vmem:[%s244 + $0xc4] sm:$0xf] %v1370
          %1499 = vst [vmem:[%s244 + $0xc8] sm:$0xf] %v1371
          %1500 = vst [vmem:[%s244 + $0xcc] sm:$0xf] %v1372
          %1501 = vst [vmem:[%s244 + $0xd0] sm:$0xf] %v1373
          %1502 = vst [vmem:[%s244 + $0xd4] sm:$0xf] %v1374
          %1503 = vst [vmem:[%s244 + $0xd8] sm:$0xf] %v1375
          %1504 = vst [vmem:[%s244 + $0xdc] sm:$0xf] %v1376
          %1505 = vst [vmem:[%s244 + $0xe0] sm:$0xf] %v1377
          %1506 = vst [vmem:[%s244 + $0xe4] sm:$0xf] %v1378
          %1507 = vst [vmem:[%s244 + $0xe8] sm:$0xf] %v1379
          %1508 = vst [vmem:[%s244 + $0xec] sm:$0xf] %v1380
          %1509 = vst [vmem:[%s244 + $0xf0] sm:$0xf] %v1381
          %1510 = vst [vmem:[%s244 + $0xf4] sm:$0xf] %v1382
          %1511 = vst [vmem:[%s244 + $0xf8] sm:$0xf] %v1383
          %1512 = vst [vmem:[%s244 + $0xfc] sm:$0xf] %v1384
          %v1513 = vadd.f32 %v1129, %v1130
          %v1514 = vadd.f32 %v1513, %v1131
          %v1515 = vadd.f32 %v1514, %v1132
          %v1516 = vadd.f32 %v1515, %v1133
          %v1517 = vadd.f32 %v1516, %v1134
          %v1518 = vadd.f32 %v1517, %v1135
          %v1519 = vadd.f32 %v1518, %v1136
          %v1520 = vadd.f32 %v1519, %v1137
          %v1521 = vadd.f32 %v1520, %v1138
          %v1522 = vadd.f32 %v1521, %v1139
          %v1523 = vadd.f32 %v1522, %v1140
          %v1524 = vadd.f32 %v1523, %v1141
          %v1525 = vadd.f32 %v1524, %v1142
          %v1526 = vadd.f32 %v1525, %v1143
          %v1527 = vadd.f32 %v1526, %v1144
          %v1528 = vadd.f32 %v1527, %v1145
          %v1529 = vadd.f32 %v1528, %v1146
          %v1530 = vadd.f32 %v1529, %v1147
          %v1531 = vadd.f32 %v1530, %v1148
          %v1532 = vadd.f32 %v1531, %v1149
          %v1533 = vadd.f32 %v1532, %v1150
          %v1534 = vadd.f32 %v1533, %v1151
          %v1535 = vadd.f32 %v1534, %v1152
          %v1536 = vadd.f32 %v1535, %v1153
          %v1537 = vadd.f32 %v1536, %v1154
          %v1538 = vadd.f32 %v1537, %v1155
          %v1539 = vadd.f32 %v1538, %v1156
          %v1540 = vadd.f32 %v1539, %v1157
          %v1541 = vadd.f32 %v1540, %v1158
          %v1542 = vadd.f32 %v1541, %v1159
          %v1543 = vadd.f32 %v1542, %v1160
          %v1544 = vadd.f32 %v1543, %v1161
          %v1545 = vadd.f32 %v1544, %v1162
          %v1546 = vadd.f32 %v1545, %v1163
          %v1547 = vadd.f32 %v1546, %v1164
          %v1548 = vadd.f32 %v1547, %v1165
          %v1549 = vadd.f32 %v1548, %v1166
          %v1550 = vadd.f32 %v1549, %v1167
          %v1551 = vadd.f32 %v1550, %v1168
          %v1552 = vadd.f32 %v1551, %v1169
          %v1553 = vadd.f32 %v1552, %v1170
          %v1554 = vadd.f32 %v1553, %v1171
          %v1555 = vadd.f32 %v1554, %v1172
          %v1556 = vadd.f32 %v1555, %v1173
          %v1557 = vadd.f32 %v1556, %v1174
          %v1558 = vadd.f32 %v1557, %v1175
          %v1559 = vadd.f32 %v1558, %v1176
          %v1560 = vadd.f32 %v1559, %v1177
          %v1561 = vadd.f32 %v1560, %v1178
          %v1562 = vadd.f32 %v1561, %v1179
          %v1563 = vadd.f32 %v1562, %v1180
          %v1564 = vadd.f32 %v1563, %v1181
          %v1565 = vadd.f32 %v1564, %v1182
          %v1566 = vadd.f32 %v1565, %v1183
          %v1567 = vadd.f32 %v1566, %v1184
          %v1568 = vadd.f32 %v1567, %v1185
          %v1569 = vadd.f32 %v1568, %v1186
          %v1570 = vadd.f32 %v1569, %v1187
          %v1571 = vadd.f32 %v1570, %v1188
          %v1572 = vadd.f32 %v1571, %v1189
          %v1573 = vadd.f32 %v1572, %v1190
          %v1574 = vadd.f32 %v1573, %v1191
          %v1575 = vadd.f32 %v1574, %v1192
          %v1576 = vrot.slane %v1575, 4
          %v1577 = vadd.f32 %v1575, %v1576
          %v1578 = vrot.slane %v1577, 2
          %v1579 = vadd.f32 %v1577, %v1578
          %v1580 = vrot.slane %v1579, 1
          %v1581 = vadd.f32 %v1579, %v1580
          %1582 = vst [vmem:[%s251] sm:$0x1] %v1581
          %v1583 = vmul.f32 %v1129, %v1129
          %v1584 = vmul.f32 %v1130, %v1130
          %v1585 = vmul.f32 %v1131, %v1131
          %v1586 = vmul.f32 %v1132, %v1132
          %v1587 = vmul.f32 %v1133, %v1133
          %v1588 = vmul.f32 %v1134, %v1134
          %v1589 = vmul.f32 %v1135, %v1135
          %v1590 = vmul.f32 %v1136, %v1136
          %v1591 = vmul.f32 %v1137, %v1137
          %v1592 = vmul.f32 %v1138, %v1138
          %v1593 = vmul.f32 %v1139, %v1139
          %v1594 = vmul.f32 %v1140, %v1140
          %v1595 = vmul.f32 %v1141, %v1141
          %v1596 = vmul.f32 %v1142, %v1142
          %v1597 = vmul.f32 %v1143, %v1143
          %v1598 = vmul.f32 %v1144, %v1144
          %v1599 = vmul.f32 %v1145, %v1145
          %v1600 = vmul.f32 %v1146, %v1146
          %v1601 = vmul.f32 %v1147, %v1147
          %v1602 = vmul.f32 %v1148, %v1148
          %v1603 = vmul.f32 %v1149, %v1149
          %v1604 = vmul.f32 %v1150, %v1150
          %v1605 = vmul.f32 %v1151, %v1151
          %v1606 = vmul.f32 %v1152, %v1152
          %v1607 = vmul.f32 %v1153, %v1153
          %v1608 = vmul.f32 %v1154, %v1154
          %v1609 = vmul.f32 %v1155, %v1155
          %v1610 = vmul.f32 %v1156, %v1156
          %v1611 = vmul.f32 %v1157, %v1157
          %v1612 = vmul.f32 %v1158, %v1158
          %v1613 = vmul.f32 %v1159, %v1159
          %v1614 = vmul.f32 %v1160, %v1160
          %v1615 = vmul.f32 %v1161, %v1161
          %v1616 = vmul.f32 %v1162, %v1162
          %v1617 = vmul.f32 %v1163, %v1163
          %v1618 = vmul.f32 %v1164, %v1164
          %v1619 = vmul.f32 %v1165, %v1165
          %v1620 = vmul.f32 %v1166, %v1166
          %v1621 = vmul.f32 %v1167, %v1167
          %v1622 = vmul.f32 %v1168, %v1168
          %v1623 = vmul.f32 %v1169, %v1169
          %v1624 = vmul.f32 %v1170, %v1170
          %v1625 = vmul.f32 %v1171, %v1171
          %v1626 = vmul.f32 %v1172, %v1172
          %v1627 = vmul.f32 %v1173, %v1173
          %v1628 = vmul.f32 %v1174, %v1174
          %v1629 = vmul.f32 %v1175, %v1175
          %v1630 = vmul.f32 %v1176, %v1176
          %v1631 = vmul.f32 %v1177, %v1177
          %v1632 = vmul.f32 %v1178, %v1178
          %v1633 = vmul.f32 %v1179, %v1179
          %v1634 = vmul.f32 %v1180, %v1180
          %v1635 = vmul.f32 %v1181, %v1181
          %v1636 = vmul.f32 %v1182, %v1182
          %v1637 = vmul.f32 %v1183, %v1183
          %v1638 = vmul.f32 %v1184, %v1184
          %v1639 = vmul.f32 %v1185, %v1185
          %v1640 = vmul.f32 %v1186, %v1186
          %v1641 = vmul.f32 %v1187, %v1187
          %v1642 = vmul.f32 %v1188, %v1188
          %v1643 = vmul.f32 %v1189, %v1189
          %v1644 = vmul.f32 %v1190, %v1190
          %v1645 = vmul.f32 %v1191, %v1191
          %v1646 = vmul.f32 %v1192, %v1192
          %v1647 = vadd.f32 %v1583, %v1584
          %v1648 = vadd.f32 %v1647, %v1585
          %v1649 = vadd.f32 %v1648, %v1586
          %v1650 = vadd.f32 %v1649, %v1587
          %v1651 = vadd.f32 %v1650, %v1588
          %v1652 = vadd.f32 %v1651, %v1589
          %v1653 = vadd.f32 %v1652, %v1590
          %v1654 = vadd.f32 %v1653, %v1591
          %v1655 = vadd.f32 %v1654, %v1592
          %v1656 = vadd.f32 %v1655, %v1593
          %v1657 = vadd.f32 %v1656, %v1594
          %v1658 = vadd.f32 %v1657, %v1595
          %v1659 = vadd.f32 %v1658, %v1596
          %v1660 = vadd.f32 %v1659, %v1597
          %v1661 = vadd.f32 %v1660, %v1598
          %v1662 = vadd.f32 %v1661, %v1599
          %v1663 = vadd.f32 %v1662, %v1600
          %v1664 = vadd.f32 %v1663, %v1601
          %v1665 = vadd.f32 %v1664, %v1602
          %v1666 = vadd.f32 %v1665, %v1603
          %v1667 = vadd.f32 %v1666, %v1604
          %v1668 = vadd.f32 %v1667, %v1605
          %v1669 = vadd.f32 %v1668, %v1606
          %v1670 = vadd.f32 %v1669, %v1607
          %v1671 = vadd.f32 %v1670, %v1608
          %v1672 = vadd.f32 %v1671, %v1609
          %v1673 = vadd.f32 %v1672, %v1610
          %v1674 = vadd.f32 %v1673, %v1611
          %v1675 = vadd.f32 %v1674, %v1612
          %v1676 = vadd.f32 %v1675, %v1613
          %v1677 = vadd.f32 %v1676, %v1614
          %v1678 = vadd.f32 %v1677, %v1615
          %v1679 = vadd.f32 %v1678, %v1616
          %v1680 = vadd.f32 %v1679, %v1617
          %v1681 = vadd.f32 %v1680, %v1618
          %v1682 = vadd.f32 %v1681, %v1619
          %v1683 = vadd.f32 %v1682, %v1620
          %v1684 = vadd.f32 %v1683, %v1621
          %v1685 = vadd.f32 %v1684, %v1622
          %v1686 = vadd.f32 %v1685, %v1623
          %v1687 = vadd.f32 %v1686, %v1624
          %v1688 = vadd.f32 %v1687, %v1625
          %v1689 = vadd.f32 %v1688, %v1626
          %v1690 = vadd.f32 %v1689, %v1627
          %v1691 = vadd.f32 %v1690, %v1628
          %v1692 = vadd.f32 %v1691, %v1629
          %v1693 = vadd.f32 %v1692, %v1630
          %v1694 = vadd.f32 %v1693, %v1631
          %v1695 = vadd.f32 %v1694, %v1632
          %v1696 = vadd.f32 %v1695, %v1633
          %v1697 = vadd.f32 %v1696, %v1634
          %v1698 = vadd.f32 %v1697, %v1635
          %v1699 = vadd.f32 %v1698, %v1636
          %v1700 = vadd.f32 %v1699, %v1637
          %v1701 = vadd.f32 %v1700, %v1638
          %v1702 = vadd.f32 %v1701, %v1639
          %v1703 = vadd.f32 %v1702, %v1640
          %v1704 = vadd.f32 %v1703, %v1641
          %v1705 = vadd.f32 %v1704, %v1642
          %v1706 = vadd.f32 %v1705, %v1643
          %v1707 = vadd.f32 %v1706, %v1644
          %v1708 = vadd.f32 %v1707, %v1645
          %v1709 = vadd.f32 %v1708, %v1646
          %v1710 = vrot.slane %v1709, 4
          %v1711 = vadd.f32 %v1709, %v1710
          %v1712 = vrot.slane %v1711, 2
          %v1713 = vadd.f32 %v1711, %v1712
          %v1714 = vrot.slane %v1713, 1
          %v1715 = vadd.f32 %v1713, %v1714
          %1716 = vst [vmem:[%s251 + $0x1] sm:$0x1] %v1715
        $region44: #{tpu_custom_call.1} parent=27 // pred_fallthru
          _
        %s1717 = sand.u32 %s110, 1
        %s1718 = scalar_lea.sflag [#allocation5], %s1717
        %s1719 = sand.u32 %s110, 1
        %s1720 = smul.addr %s1719, 256
        %s1721 = scalar_lea.vmem [#allocation8], %s1720
        %s1722 = sand.u32 %s138, 1
        %s1723 = scalar_lea.sflag [#allocation10], %s1722
        %s1724 = sand.u32 %s138, 1
        %s1725 = smul.addr %s1724, 8
        %s1726 = scalar_lea.vmem [#allocation9], %s1725
        // Predicated region
        $region45: #{tpu_custom_call.1} parent=27 // pred_check
          %p1727 = pneg %p120
        $region46: #{tpu_custom_call.1} parent=27 // pred_check_branch
          %1729 = sbr.rel (%p1727) target = $region48
        $region47: #{tpu_custom_call.1} parent=27 // pred_region
          %s1730 = smul.u32 64, %s30
          %s1732 = ssub.s32 4096, 4096
          %1733 = vsyncadd %s1718, %s1732
          %s1734 = sadd.s32 %s31, %s1730
          %s1735 = smul.addr %s1734, 64
          %s1736 = scalar_lea.hbm %s2, %s1735
          %s1737 = sshll.u32 %s1721, 4
          %s1738 = int_to_ptr.vmem [resolvable:$true] %s1737
          %1743 = dma.vmem_to_hbm [thread:$0]  %s1738, 4096, %s1736, %s1718, 64, 64, 4
        $region48: #{tpu_custom_call.1} parent=27 // pred_fallthru
          _
        // Predicated region
        $region49: #{tpu_custom_call.1} parent=27 // pred_check
          %p1744 = pneg %p148
        $region50: #{tpu_custom_call.1} parent=27 // pred_check_branch
          %1746 = sbr.rel (%p1744) target = $region52
        $region51: #{tpu_custom_call.1} parent=27 // pred_region
          %s1748 = ssub.s32 128, 128
          %1749 = vsyncadd %s1723, %s1748
          %s1750 = sadd.s32 %s31, %s30
          %s1751 = smul.addr %s1750, 128
          %s1752 = scalar_lea.hbm %s3, %s1751
          %s1754 = sshll.u32 %s1726, 4
          %s1755 = int_to_ptr.vmem [resolvable:$true] %s1754
          %1757 = dma.vmem_to_hbm [thread:$0]  %s1755, 128, %s1752, %s1723
        $region52: #{tpu_custom_call.1} parent=27 // pred_fallthru
          _
      $region28: #{tpu_custom_call.1} parent=5 // pred_fallthru
        _
      %p1758 = scmp.le.s32.totalorder 2, %s20
      // Predicated region
      $region53: #{tpu_custom_call.1} parent=5 // pred_check
        %p1759 = pneg %p1758
      $region54: #{tpu_custom_call.1} parent=5 // pred_check_branch
        %1761 = sbr.rel (%p1759) target = $region56
      $region55: #{tpu_custom_call.1} parent=5 // pred_region
        %s1762 = ssub.s32 %s20, 2
        // Predicated region
        $region57: #{tpu_custom_call.1} parent=55 // pred_check
          %p1763 = pneg %p126
        $region58: #{tpu_custom_call.1} parent=55 // pred_check_branch
          %1765 = sbr.rel (%p1763) target = $region60
        $region59: #{tpu_custom_call.1} parent=55 // pred_region
          %s1766 = sand.u32 %s111, 1
          %s1767 = scalar_lea.sflag [#allocation5], %s1766
          %s1768 = sand.u32 %s111, 1
          %s1769 = smul.addr %s1768, 256
          %s1770 = scalar_lea.vmem [#allocation8], %s1769
          %1771 = dma.done %s1767, 4096
        $region60: #{tpu_custom_call.1} parent=55 // pred_fallthru
          _
        // Predicated region
        $region61: #{tpu_custom_call.1} parent=55 // pred_check
          %p1772 = pneg %p154
        $region62: #{tpu_custom_call.1} parent=55 // pred_check_branch
          %1774 = sbr.rel (%p1772) target = $region64
        $region63: #{tpu_custom_call.1} parent=55 // pred_region
          %s1775 = sand.u32 %s139, 1
          %s1776 = scalar_lea.sflag [#allocation10], %s1775
          %s1777 = sand.u32 %s139, 1
          %s1778 = smul.addr %s1777, 8
          %s1779 = scalar_lea.vmem [#allocation9], %s1778
          %1780 = dma.done %s1776, 128
        $region64: #{tpu_custom_call.1} parent=55 // pred_fallthru
          _
      $region56: #{tpu_custom_call.1} parent=5 // pred_fallthru
        _
    $region6: #{tpu_custom_call.1} parent=1 // loop_footer
      %s24 = sadd.s32 1, %s20
    $region7: #{tpu_custom_call.1} parent=1 // loop_footer_branch
      %19 = sbr.rel target = $region3
    $region8: #{tpu_custom_call.1} parent=1 // loop_exit
      _
    %1781 = vsyncpa [#allocation4], 1
    %s1782 = scalar_lea.sflag [#allocation4], 1
    %1783 = vsyncpa %s1782, 1
    %1784 = vsyncpa [#allocation7], 1
    %1785 = vsyncpa [#allocation5], 1
    %s1786 = scalar_lea.sflag [#allocation5], 1
    %1787 = vsyncpa %s1786, 1
    %1788 = vsyncpa [#allocation10], 1
    %s1789 = scalar_lea.sflag [#allocation10], 1
    %1790 = vsyncpa %s1789, 1

</llo_original>
